<compile_context>
chip_gen: v5e
topology: v5e:2x2
jax: 0.10.0
libtpu: 0.0.40
codegen_flags: <defaults>
</compile_context>

<pallas_src>
import functools

import jax
import jax.numpy as jnp
from jax import lax
from jax.experimental import pallas as pl
from jax.experimental.pallas import tpu as pltpu


_BAND = 128          # pivot-band width = one vreg of lanes
_TRAIL_CHUNK = 512   # column-chunk width for the MXU trailing update
_UNROLL_MAX = 64     # fully unroll the elimination below this size


def _round_up(x: int, m: int) -> int:
    return (x + m - 1) // m * m


def _nr_reciprocal(p):
    """EUP approx reciprocal + one Newton-Raphson refinement step.

    The exact f32 divide is a multi-op sequence on the strictly serial
    per-pivot dependency chain; the approx reciprocal is a single EUP op in an
    otherwise idle VLIW slot, and the NR step keeps the per-pivot relative
    error at rounding level so it does not compound over n elimination steps.
    """
    r0 = pl.reciprocal(p, approx=True)
    return r0 * (2.0 - p * r0)


def _mse_epilogue(a_ref, u_ref, out_ref, *, n, lane_row):
    """Column n of the reduced augmented system holds u_pred = K^{-1} q."""
    # Extract it from the single static 128-lane band that contains it (no
    # full-matrix masked pass, no full-matrix iota).
    bn = (n // _BAND) * _BAND
    band_vals = a_ref[:, bn:bn + _BAND]
    sol = jnp.sum(jnp.where(lane_row == (n - bn), band_vals, 0.0),
                  axis=1, keepdims=True)                      # (R, 1)
    diff = sol - u_ref[...]                                   # padded rows: 0 - 0
    # mse_loss averages over the n*1 real elements (divide by n, not rows_pad).
    out_ref[...] = jnp.sum(diff * diff, keepdims=True) / float(n)


def _gj_small_kernel(a_ref, u_ref, out_ref, *, n):
    """In-place Gauss-Jordan for n <= 128 (single 128-column pivot band)."""
    rows_pad, cols_pad = a_ref.shape

    # Hoisted iotas (JAX does not CSE broadcast_in_dim).  Only band-sized
    # (R,128)/(1,128)/(R,1) iotas are built -- never a full (R, cols_pad) one.
    row_ids = lax.broadcasted_iota(jnp.int32, (rows_pad, 1), 0)
    lane_band = lax.broadcasted_iota(jnp.int32, (rows_pad, _BAND), 1)
    lane_row = lax.broadcasted_iota(jnp.int32, (1, _BAND), 1)

    # TODO(synk): torch.inverse uses LU with partial pivoting; this unpivoted
    # Gauss-Jordan is only appropriate for well-conditioned / SPD stiffness
    # matrices (no runtime guard on a zero pivot).
    def step(i):
        a = a_ref[...]                                        # (R, C)
        band_vals = a[:, 0:_BAND]                             # all pivot cols live in band 0
        row_i = a_ref[pl.ds(i, 1), :]                         # (1, C) pivot row, plain vld
        # Pivot value / pivot column from the band only.  For static i the
        # masks fold to compile-time constants.
        piv = jnp.sum(jnp.where(lane_row == i, row_i[:, 0:_BAND], 0.0),
                      axis=1, keepdims=True)                  # (1, 1)
        col = jnp.sum(jnp.where(lane_band == i, band_vals, 0.0),
                      axis=1, keepdims=True)                  # (R, 1)
        inv_p = _nr_reciprocal(piv)
        # One-hot trick: subtracting e_i from the pivot column makes row i land
        # exactly on the normalized pivot row after the single rank-1 update.
        f = col - (row_ids == i).astype(jnp.float32)          # (R, 1)
        a_ref[...] = a - f * (row_i * inv_p)

    if n <= _UNROLL_MAX:
        # Static trip count: full unroll (constant masks, LLO visibility).
        for i in range(n):
            step(i)
    else:
        def body(i, carry):
            step(i)
            return carry
        lax.fori_loop(0, n, body, 0)

    _mse_epilogue(a_ref, u_ref, out_ref, n=n, lane_row=lane_row)


def _gj_blocked_kernel(a_ref, u_ref, out_ref, wbuf_ref, *, n):
    """Blocked right-looking Gauss-Jordan for n > 128.

    Per 128-column pivot band:
      * rank-1 VPU updates touch only the band's 128 columns plus the
        128-column transform accumulator Wbuf (columns left of the band are
        already unit columns; columns right of it stay untouched),
      * then one rank-128 MXU update of the trailing columns:
            A[:, trail] += W @ A[band_rows, trail]
        where the band's composed elimination transform is T = I + W S
        (S = band-row selector).  Wbuf starts as the band-row identity pattern
        so W = Wbuf_final - pattern.
    """
    rows_pad, cols_pad = a_ref.shape

    row_ids = lax.broadcasted_iota(jnp.int32, (rows_pad, 1), 0)
    lane_band = lax.broadcasted_iota(jnp.int32, (rows_pad, _BAND), 1)
    lane_row = lax.broadcasted_iota(jnp.int32, (1, _BAND), 1)

    # TODO(synk): unpivoted elimination (see _gj_small_kernel note).
    # TODO(synk): use a 256-wide panel on v6e/v7x (2x256^2 MXU) and stream
    # column panels from HBM (pl.ANY + emit_pipeline) once the whole augmented
    # matrix no longer fits v7x's 64 MiB per-core VMEM.
    for band_start in range(0, n, _BAND):             # static loop over pivot bands
        band_end = band_start + _BAND                 # <= cols_pad by construction
        n_piv = min(_BAND, n - band_start)

        # Band-row identity pattern: Wbuf starts as S^T.
        pattern = (row_ids == (lane_row + band_start)).astype(jnp.float32)
        wbuf_ref[...] = pattern

        def piv_body(l, carry, band_start=band_start, band_end=band_end):
            i = band_start + l                                     # global pivot row
            band_vals = a_ref[:, band_start:band_end]              # (R, 128)
            wb = wbuf_ref[...]                                     # (R, 128)
            row_band = a_ref[pl.ds(i, 1), band_start:band_end]     # (1, 128)
            row_w = wbuf_ref[pl.ds(i, 1), :]                       # (1, 128)
            piv = jnp.sum(jnp.where(lane_row == l, row_band, 0.0),
                          axis=1, keepdims=True)                   # (1, 1)
            col = jnp.sum(jnp.where(lane_band == l, band_vals, 0.0),
                          axis=1, keepdims=True)                   # (R, 1)
            inv_p = _nr_reciprocal(piv)
            f = col - (row_ids == i).astype(jnp.float32)           # (R, 1)
            a_ref[:, band_start:band_end] = band_vals - f * (row_band * inv_p)
            wbuf_ref[...] = wb - f * (row_w * inv_p)
            return carry

        lax.fori_loop(0, n_piv, piv_body, 0)

        # Rank-128 MXU update of the trailing columns, chunked so temporaries
        # stay small relative to VMEM.
        if band_end < cols_pad:
            w_mat = wbuf_ref[...] - pattern                        # (R, 128)
            for t0 in range(band_end, cols_pad, _TRAIL_CHUNK):
                t1 = min(t0 + _TRAIL_CHUNK, cols_pad)
                band_rows = a_ref[band_start:band_end, t0:t1]      # (128, T)
                a_ref[:, t0:t1] = a_ref[:, t0:t1] + jnp.dot(
                    w_mat, band_rows, preferred_element_type=jnp.float32)

    _mse_epilogue(a_ref, u_ref, out_ref, n=n, lane_row=lane_row)


def _compiler_params(work_bytes: int):
    """Chip-aware scoped-VMEM request: only what the working set needs, with
    headroom below the physical per-core VMEM (64 MiB v7x, 128 MiB v5e/v6e)."""
    if work_bytes <= (12 << 20):
        return None                     # default scoped limit is plenty
    cap = 64 << 20                      # conservative fallback (v7x per-core)
    try:
        cap = int(getattr(pltpu.get_tpu_info(), "vmem_capacity_bytes", cap))
    except Exception:
        pass
    limit = min(work_bytes + (4 << 20), cap - cap // 8)
    return pltpu.CompilerParams(vmem_limit_bytes=int(limit))


def stiffness_to_displacement_loss(k: jax.Array, q: jax.Array, u: jax.Array) -> jax.Array:
    """k: (n, n) f32, q: (n, 1) f32, u: (n, 1) f32 -> scalar f32 (MSE)."""
    n = k.shape[0]
    small = n <= _BAND
    # Small path keeps sublane padding minimal; blocked path pads rows to the
    # band size so each band's 128 rows can be sliced for the MXU update.
    rows_pad = _round_up(max(n, 8), 8) if small else _round_up(n, _BAND)
    cols_pad = _round_up(n + 1, _BAND)

    # Lane-padded augmented system [K | q | 0]; this is also the in-place
    # working buffer inside the kernel (the input block is a private VMEM copy).
    # TODO(synk): for small n, pass k/q/u directly and assemble [K | q] in VMEM
    # inside the kernel to avoid this padded HBM round trip.
    a = jnp.zeros((rows_pad, cols_pad), jnp.float32)
    a = a.at[:n, :n].set(k.astype(jnp.float32))
    a = a.at[:n, n:n + 1].set(q.astype(jnp.float32))
    u_pad = jnp.zeros((rows_pad, 1), jnp.float32).at[:n, :].set(u.astype(jnp.float32))

    a_bytes = 4 * rows_pad * cols_pad
    if small:
        kernel = functools.partial(_gj_small_kernel, n=n)
        scratch = []
        work_bytes = 2 * a_bytes                       # A + one full-size temporary
    else:
        kernel = functools.partial(_gj_blocked_kernel, n=n)
        scratch = [pltpu.VMEM((rows_pad, _BAND), jnp.float32)]
        work_bytes = a_bytes + 4 * rows_pad * (3 * _BAND + 2 * _TRAIL_CHUNK)

    # TODO(synk): if batches of (K, q, u) systems are needed, add a leading
    # batch grid axis with dimension_semantics=("parallel",) so both v7x
    # TensorCores are used.
    out = pl.pallas_call(
        kernel,
        out_shape=jax.ShapeDtypeStruct((1, 1), jnp.float32),
        in_specs=[
            pl.BlockSpec(memory_space=pltpu.MemorySpace.VMEM),   # augmented [K | q]
            pl.BlockSpec(memory_space=pltpu.MemorySpace.VMEM),   # u (zero-padded)
        ],
        out_specs=pl.BlockSpec(memory_space=pltpu.MemorySpace.VMEM),
        scratch_shapes=scratch,
        compiler_params=_compiler_params(work_bytes),
    )(a, u_pad)
    return out[0, 0]


if __name__ == "__main__":
    def make_case(key, n):
        ka, kq, ku = jax.random.split(key, 3)
        a = jax.random.normal(ka, (n, n), dtype=jnp.float32)
        k = a @ a.T + n * jnp.eye(n, dtype=jnp.float32)   # SPD, well conditioned
        q = jax.random.normal(kq, (n, 1), dtype=jnp.float32)
        u = jax.random.normal(ku, (n, 1), dtype=jnp.float32)
        return k, q, u

    root = jax.random.PRNGKey(0)
    key_small, key_blocked = jax.random.split(root)

    # Small path: n = 16 (single band, fully unrolled elimination).
    k, q, u = make_case(key_small, 16)
    loss = jax.block_until_ready(stiffness_to_displacement_loss(k, q, u))
    ref = jnp.mean((jnp.linalg.inv(k) @ q - u) ** 2)
    assert jnp.allclose(loss, ref, rtol=1e-3, atol=1e-5), (loss, ref)

    # Blocked path: n = 192 (two pivot bands, MXU trailing update).
    k, q, u = make_case(key_blocked, 192)
    loss = jax.block_until_ready(stiffness_to_displacement_loss(k, q, u))
    ref = jnp.mean((jnp.linalg.inv(k) @ q - u) ** 2)
    assert jnp.allclose(loss, ref, rtol=1e-3, atol=1e-5), (loss, ref)

    print("KERNEL_OK")
</pallas_src>

<mosaic_0001>
module attributes {stable_mosaic.version = 11 : i64} {
  func.func @_gj_small_kernel(%arg0: memref<16x128xf32, #tpu.memory_space<vmem>>, %arg1: memref<16x1xf32, #tpu.memory_space<vmem>>, %arg2: memref<1x1xf32, #tpu.memory_space<vmem>>) attributes {dimension_semantics = [], scalar_prefetch = 0 : i64, scratch_operands = 0 : i64, tpu.core_type = #tpu.core_type<tc>} {
    %0 = tpu.iota {dimensions = array<i32: 0>} : vector<16x1xi32>
    %1 = tpu.iota {dimensions = array<i32: 1>} : vector<16x128xi32>
    %2 = tpu.iota {dimensions = array<i32: 1>} : vector<1x128xi32>
    %c0 = arith.constant 0 : index
    %c0_0 = arith.constant 0 : index
    %3 = vector.load %arg0[%c0, %c0_0] : memref<16x128xf32, #tpu.memory_space<vmem>>, vector<16x128xf32>
    %c0_1 = arith.constant 0 : index
    %c0_2 = arith.constant 0 : index
    %4 = vector.load %arg0[%c0_1, %c0_2] : memref<16x128xf32, #tpu.memory_space<vmem>>, vector<1x128xf32>
    %c0_i32 = arith.constant 0 : i32
    %5 = vector.broadcast %c0_i32 : i32 to vector<1x128xi32>
    %6 = arith.cmpi eq, %2, %5 : vector<1x128xi32>
    %cst = arith.constant 0.000000e+00 : f32
    %7 = vector.broadcast %cst : f32 to vector<1x128xf32>
    %8 = arith.select %6, %4, %7 : vector<1x128xi1>, vector<1x128xf32>
    %cst_3 = arith.constant dense<0.000000e+00> : vector<1xf32>
    %9 = vector.multi_reduction <add>, %8, %cst_3 [1] : vector<1x128xf32> to vector<1xf32>
    %10 = vector.shape_cast %9 : vector<1xf32> to vector<1x1xf32>
    %c0_i32_4 = arith.constant 0 : i32
    %11 = vector.broadcast %c0_i32_4 : i32 to vector<16x128xi32>
    %12 = arith.cmpi eq, %1, %11 : vector<16x128xi32>
    %cst_5 = arith.constant 0.000000e+00 : f32
    %13 = vector.broadcast %cst_5 : f32 to vector<16x128xf32>
    %14 = arith.select %12, %3, %13 : vector<16x128xi1>, vector<16x128xf32>
    %cst_6 = arith.constant dense<0.000000e+00> : vector<16xf32>
    %15 = vector.multi_reduction <add>, %14, %cst_6 [1] : vector<16x128xf32> to vector<16xf32>
    %16 = vector.shape_cast %15 : vector<16xf32> to vector<16x1xf32>
    %17 = tpu.reciprocal %10 {approx = true} : vector<1x1xf32> -> vector<1x1xf32>
    %18 = arith.mulf %10, %17 : vector<1x1xf32>
    %cst_7 = arith.constant 2.000000e+00 : f32
    %19 = vector.broadcast %cst_7 : f32 to vector<1x1xf32>
    %20 = arith.subf %19, %18 : vector<1x1xf32>
    %21 = arith.mulf %17, %20 : vector<1x1xf32>
    %c0_i32_8 = arith.constant 0 : i32
    %22 = vector.broadcast %c0_i32_8 : i32 to vector<16x1xi32>
    %23 = arith.cmpi eq, %0, %22 : vector<16x1xi32>
    %24 = arith.extui %23 : vector<16x1xi1> to vector<16x1xi32>
    %25 = arith.sitofp %24 : vector<16x1xi32> to vector<16x1xf32>
    %26 = arith.subf %16, %25 : vector<16x1xf32>
    %27 = vector.broadcast %21 : vector<1x1xf32> to vector<1x128xf32>
    %28 = arith.mulf %4, %27 : vector<1x128xf32>
    %29 = vector.broadcast %26 : vector<16x1xf32> to vector<16x128xf32>
    %30 = vector.broadcast %28 : vector<1x128xf32> to vector<16x128xf32>
    %31 = arith.mulf %29, %30 : vector<16x128xf32>
    %32 = arith.subf %3, %31 : vector<16x128xf32>
    %c0_9 = arith.constant 0 : index
    %c0_10 = arith.constant 0 : index
    %33 = vector.load %arg0[%c0_9, %c0_10] : memref<16x128xf32, #tpu.memory_space<vmem>>, vector<16x128xf32>
    tpu.vector_store %arg0[%c0_9, %c0_10], %32 {strides = array<i32>} : memref<16x128xf32, #tpu.memory_space<vmem>>, vector<16x128xf32>,
    %c0_11 = arith.constant 0 : index
    %c0_12 = arith.constant 0 : index
    %34 = vector.load %arg0[%c0_11, %c0_12] : memref<16x128xf32, #tpu.memory_space<vmem>>, vector<16x128xf32>
    %c1 = arith.constant 1 : index
    %c0_13 = arith.constant 0 : index
    %35 = vector.load %arg0[%c1, %c0_13] : memref<16x128xf32, #tpu.memory_space<vmem>>, vector<1x128xf32>
    %c1_i32 = arith.constant 1 : i32
    %36 = vector.broadcast %c1_i32 : i32 to vector<1x128xi32>
    %37 = arith.cmpi eq, %2, %36 : vector<1x128xi32>
    %cst_14 = arith.constant 0.000000e+00 : f32
    %38 = vector.broadcast %cst_14 : f32 to vector<1x128xf32>
    %39 = arith.select %37, %35, %38 : vector<1x128xi1>, vector<1x128xf32>
    %cst_15 = arith.constant dense<0.000000e+00> : vector<1xf32>
    %40 = vector.multi_reduction <add>, %39, %cst_15 [1] : vector<1x128xf32> to vector<1xf32>
    %41 = vector.shape_cast %40 : vector<1xf32> to vector<1x1xf32>
    %c1_i32_16 = arith.constant 1 : i32
    %42 = vector.broadcast %c1_i32_16 : i32 to vector<16x128xi32>
    %43 = arith.cmpi eq, %1, %42 : vector<16x128xi32>
    %cst_17 = arith.constant 0.000000e+00 : f32
    %44 = vector.broadcast %cst_17 : f32 to vector<16x128xf32>
    %45 = arith.select %43, %34, %44 : vector<16x128xi1>, vector<16x128xf32>
    %cst_18 = arith.constant dense<0.000000e+00> : vector<16xf32>
    %46 = vector.multi_reduction <add>, %45, %cst_18 [1] : vector<16x128xf32> to vector<16xf32>
    %47 = vector.shape_cast %46 : vector<16xf32> to vector<16x1xf32>
    %48 = tpu.reciprocal %41 {approx = true} : vector<1x1xf32> -> vector<1x1xf32>
    %49 = arith.mulf %41, %48 : vector<1x1xf32>
    %cst_19 = arith.constant 2.000000e+00 : f32
    %50 = vector.broadcast %cst_19 : f32 to vector<1x1xf32>
    %51 = arith.subf %50, %49 : vector<1x1xf32>
    %52 = arith.mulf %48, %51 : vector<1x1xf32>
    %c1_i32_20 = arith.constant 1 : i32
    %53 = vector.broadcast %c1_i32_20 : i32 to vector<16x1xi32>
    %54 = arith.cmpi eq, %0, %53 : vector<16x1xi32>
    %55 = arith.extui %54 : vector<16x1xi1> to vector<16x1xi32>
    %56 = arith.sitofp %55 : vector<16x1xi32> to vector<16x1xf32>
    %57 = arith.subf %47, %56 : vector<16x1xf32>
    %58 = vector.broadcast %52 : vector<1x1xf32> to vector<1x128xf32>
    %59 = arith.mulf %35, %58 : vector<1x128xf32>
    %60 = vector.broadcast %57 : vector<16x1xf32> to vector<16x128xf32>
    %61 = vector.broadcast %59 : vector<1x128xf32> to vector<16x128xf32>
    %62 = arith.mulf %60, %61 : vector<16x128xf32>
    %63 = arith.subf %34, %62 : vector<16x128xf32>
    %c0_21 = arith.constant 0 : index
    %c0_22 = arith.constant 0 : index
    %64 = vector.load %arg0[%c0_21, %c0_22] : memref<16x128xf32, #tpu.memory_space<vmem>>, vector<16x128xf32>
    tpu.vector_store %arg0[%c0_21, %c0_22], %63 {strides = array<i32>} : memref<16x128xf32, #tpu.memory_space<vmem>>, vector<16x128xf32>,
    %c0_23 = arith.constant 0 : index
    %c0_24 = arith.constant 0 : index
    %65 = vector.load %arg0[%c0_23, %c0_24] : memref<16x128xf32, #tpu.memory_space<vmem>>, vector<16x128xf32>
    %c2 = arith.constant 2 : index
    %c0_25 = arith.constant 0 : index
    %66 = vector.load %arg0[%c2, %c0_25] : memref<16x128xf32, #tpu.memory_space<vmem>>, vector<1x128xf32>
    %c2_i32 = arith.constant 2 : i32
    %67 = vector.broadcast %c2_i32 : i32 to vector<1x128xi32>
    %68 = arith.cmpi eq, %2, %67 : vector<1x128xi32>
    %cst_26 = arith.constant 0.000000e+00 : f32
    %69 = vector.broadcast %cst_26 : f32 to vector<1x128xf32>
    %70 = arith.select %68, %66, %69 : vector<1x128xi1>, vector<1x128xf32>
    %cst_27 = arith.constant dense<0.000000e+00> : vector<1xf32>
    %71 = vector.multi_reduction <add>, %70, %cst_27 [1] : vector<1x128xf32> to vector<1xf32>
    %72 = vector.shape_cast %71 : vector<1xf32> to vector<1x1xf32>
    %c2_i32_28 = arith.constant 2 : i32
    %73 = vector.broadcast %c2_i32_28 : i32 to vector<16x128xi32>
    %74 = arith.cmpi eq, %1, %73 : vector<16x128xi32>
    %cst_29 = arith.constant 0.000000e+00 : f32
    %75 = vector.broadcast %cst_29 : f32 to vector<16x128xf32>
    %76 = arith.select %74, %65, %75 : vector<16x128xi1>, vector<16x128xf32>
    %cst_30 = arith.constant dense<0.000000e+00> : vector<16xf32>
    %77 = vector.multi_reduction <add>, %76, %cst_30 [1] : vector<16x128xf32> to vector<16xf32>
    %78 = vector.shape_cast %77 : vector<16xf32> to vector<16x1xf32>
    %79 = tpu.reciprocal %72 {approx = true} : vector<1x1xf32> -> vector<1x1xf32>
    %80 = arith.mulf %72, %79 : vector<1x1xf32>
    %cst_31 = arith.constant 2.000000e+00 : f32
    %81 = vector.broadcast %cst_31 : f32 to vector<1x1xf32>
    %82 = arith.subf %81, %80 : vector<1x1xf32>
    %83 = arith.mulf %79, %82 : vector<1x1xf32>
    %c2_i32_32 = arith.constant 2 : i32
    %84 = vector.broadcast %c2_i32_32 : i32 to vector<16x1xi32>
    %85 = arith.cmpi eq, %0, %84 : vector<16x1xi32>
    %86 = arith.extui %85 : vector<16x1xi1> to vector<16x1xi32>
    %87 = arith.sitofp %86 : vector<16x1xi32> to vector<16x1xf32>
    %88 = arith.subf %78, %87 : vector<16x1xf32>
    %89 = vector.broadcast %83 : vector<1x1xf32> to vector<1x128xf32>
    %90 = arith.mulf %66, %89 : vector<1x128xf32>
    %91 = vector.broadcast %88 : vector<16x1xf32> to vector<16x128xf32>
    %92 = vector.broadcast %90 : vector<1x128xf32> to vector<16x128xf32>
    %93 = arith.mulf %91, %92 : vector<16x128xf32>
    %94 = arith.subf %65, %93 : vector<16x128xf32>
    %c0_33 = arith.constant 0 : index
    %c0_34 = arith.constant 0 : index
    %95 = vector.load %arg0[%c0_33, %c0_34] : memref<16x128xf32, #tpu.memory_space<vmem>>, vector<16x128xf32>
    tpu.vector_store %arg0[%c0_33, %c0_34], %94 {strides = array<i32>} : memref<16x128xf32, #tpu.memory_space<vmem>>, vector<16x128xf32>,
    %c0_35 = arith.constant 0 : index
    %c0_36 = arith.constant 0 : index
    %96 = vector.load %arg0[%c0_35, %c0_36] : memref<16x128xf32, #tpu.memory_space<vmem>>, vector<16x128xf32>
    %c3 = arith.constant 3 : index
    %c0_37 = arith.constant 0 : index
    %97 = vector.load %arg0[%c3, %c0_37] : memref<16x128xf32, #tpu.memory_space<vmem>>, vector<1x128xf32>
    %c3_i32 = arith.constant 3 : i32
    %98 = vector.broadcast %c3_i32 : i32 to vector<1x128xi32>
    %99 = arith.cmpi eq, %2, %98 : vector<1x128xi32>
    %cst_38 = arith.constant 0.000000e+00 : f32
    %100 = vector.broadcast %cst_38 : f32 to vector<1x128xf32>
    %101 = arith.select %99, %97, %100 : vector<1x128xi1>, vector<1x128xf32>
    %cst_39 = arith.constant dense<0.000000e+00> : vector<1xf32>
    %102 = vector.multi_reduction <add>, %101, %cst_39 [1] : vector<1x128xf32> to vector<1xf32>
    %103 = vector.shape_cast %102 : vector<1xf32> to vector<1x1xf32>
    %c3_i32_40 = arith.constant 3 : i32
    %104 = vector.broadcast %c3_i32_40 : i32 to vector<16x128xi32>
    %105 = arith.cmpi eq, %1, %104 : vector<16x128xi32>
    %cst_41 = arith.constant 0.000000e+00 : f32
    %106 = vector.broadcast %cst_41 : f32 to vector<16x128xf32>
    %107 = arith.select %105, %96, %106 : vector<16x128xi1>, vector<16x128xf32>
    %cst_42 = arith.constant dense<0.000000e+00> : vector<16xf32>
    %108 = vector.multi_reduction <add>, %107, %cst_42 [1] : vector<16x128xf32> to vector<16xf32>
    %109 = vector.shape_cast %108 : vector<16xf32> to vector<16x1xf32>
    %110 = tpu.reciprocal %103 {approx = true} : vector<1x1xf32> -> vector<1x1xf32>
    %111 = arith.mulf %103, %110 : vector<1x1xf32>
    %cst_43 = arith.constant 2.000000e+00 : f32
    %112 = vector.broadcast %cst_43 : f32 to vector<1x1xf32>
    %113 = arith.subf %112, %111 : vector<1x1xf32>
    %114 = arith.mulf %110, %113 : vector<1x1xf32>
    %c3_i32_44 = arith.constant 3 : i32
    %115 = vector.broadcast %c3_i32_44 : i32 to vector<16x1xi32>
    %116 = arith.cmpi eq, %0, %115 : vector<16x1xi32>
    %117 = arith.extui %116 : vector<16x1xi1> to vector<16x1xi32>
    %118 = arith.sitofp %117 : vector<16x1xi32> to vector<16x1xf32>
    %119 = arith.subf %109, %118 : vector<16x1xf32>
    %120 = vector.broadcast %114 : vector<1x1xf32> to vector<1x128xf32>
    %121 = arith.mulf %97, %120 : vector<1x128xf32>
    %122 = vector.broadcast %119 : vector<16x1xf32> to vector<16x128xf32>
    %123 = vector.broadcast %121 : vector<1x128xf32> to vector<16x128xf32>
    %124 = arith.mulf %122, %123 : vector<16x128xf32>
    %125 = arith.subf %96, %124 : vector<16x128xf32>
    %c0_45 = arith.constant 0 : index
    %c0_46 = arith.constant 0 : index
    %126 = vector.load %arg0[%c0_45, %c0_46] : memref<16x128xf32, #tpu.memory_space<vmem>>, vector<16x128xf32>
    tpu.vector_store %arg0[%c0_45, %c0_46], %125 {strides = array<i32>} : memref<16x128xf32, #tpu.memory_space<vmem>>, vector<16x128xf32>,
    %c0_47 = arith.constant 0 : index
    %c0_48 = arith.constant 0 : index
    %127 = vector.load %arg0[%c0_47, %c0_48] : memref<16x128xf32, #tpu.memory_space<vmem>>, vector<16x128xf32>
    %c4 = arith.constant 4 : index
    %c0_49 = arith.constant 0 : index
    %128 = vector.load %arg0[%c4, %c0_49] : memref<16x128xf32, #tpu.memory_space<vmem>>, vector<1x128xf32>
    %c4_i32 = arith.constant 4 : i32
    %129 = vector.broadcast %c4_i32 : i32 to vector<1x128xi32>
    %130 = arith.cmpi eq, %2, %129 : vector<1x128xi32>
    %cst_50 = arith.constant 0.000000e+00 : f32
    %131 = vector.broadcast %cst_50 : f32 to vector<1x128xf32>
    %132 = arith.select %130, %128, %131 : vector<1x128xi1>, vector<1x128xf32>
    %cst_51 = arith.constant dense<0.000000e+00> : vector<1xf32>
    %133 = vector.multi_reduction <add>, %132, %cst_51 [1] : vector<1x128xf32> to vector<1xf32>
    %134 = vector.shape_cast %133 : vector<1xf32> to vector<1x1xf32>
    %c4_i32_52 = arith.constant 4 : i32
    %135 = vector.broadcast %c4_i32_52 : i32 to vector<16x128xi32>
    %136 = arith.cmpi eq, %1, %135 : vector<16x128xi32>
    %cst_53 = arith.constant 0.000000e+00 : f32
    %137 = vector.broadcast %cst_53 : f32 to vector<16x128xf32>
    %138 = arith.select %136, %127, %137 : vector<16x128xi1>, vector<16x128xf32>
    %cst_54 = arith.constant dense<0.000000e+00> : vector<16xf32>
    %139 = vector.multi_reduction <add>, %138, %cst_54 [1] : vector<16x128xf32> to vector<16xf32>
    %140 = vector.shape_cast %139 : vector<16xf32> to vector<16x1xf32>
    %141 = tpu.reciprocal %134 {approx = true} : vector<1x1xf32> -> vector<1x1xf32>
    %142 = arith.mulf %134, %141 : vector<1x1xf32>
    %cst_55 = arith.constant 2.000000e+00 : f32
    %143 = vector.broadcast %cst_55 : f32 to vector<1x1xf32>
    %144 = arith.subf %143, %142 : vector<1x1xf32>
    %145 = arith.mulf %141, %144 : vector<1x1xf32>
    %c4_i32_56 = arith.constant 4 : i32
    %146 = vector.broadcast %c4_i32_56 : i32 to vector<16x1xi32>
    %147 = arith.cmpi eq, %0, %146 : vector<16x1xi32>
    %148 = arith.extui %147 : vector<16x1xi1> to vector<16x1xi32>
    %149 = arith.sitofp %148 : vector<16x1xi32> to vector<16x1xf32>
    %150 = arith.subf %140, %149 : vector<16x1xf32>
    %151 = vector.broadcast %145 : vector<1x1xf32> to vector<1x128xf32>
    %152 = arith.mulf %128, %151 : vector<1x128xf32>
    %153 = vector.broadcast %150 : vector<16x1xf32> to vector<16x128xf32>
    %154 = vector.broadcast %152 : vector<1x128xf32> to vector<16x128xf32>
    %155 = arith.mulf %153, %154 : vector<16x128xf32>
    %156 = arith.subf %127, %155 : vector<16x128xf32>
    %c0_57 = arith.constant 0 : index
    %c0_58 = arith.constant 0 : index
    %157 = vector.load %arg0[%c0_57, %c0_58] : memref<16x128xf32, #tpu.memory_space<vmem>>, vector<16x128xf32>
    tpu.vector_store %arg0[%c0_57, %c0_58], %156 {strides = array<i32>} : memref<16x128xf32, #tpu.memory_space<vmem>>, vector<16x128xf32>,
    %c0_59 = arith.constant 0 : index
    %c0_60 = arith.constant 0 : index
    %158 = vector.load %arg0[%c0_59, %c0_60] : memref<16x128xf32, #tpu.memory_space<vmem>>, vector<16x128xf32>
    %c5 = arith.constant 5 : index
    %c0_61 = arith.constant 0 : index
    %159 = vector.load %arg0[%c5, %c0_61] : memref<16x128xf32, #tpu.memory_space<vmem>>, vector<1x128xf32>
    %c5_i32 = arith.constant 5 : i32
    %160 = vector.broadcast %c5_i32 : i32 to vector<1x128xi32>
    %161 = arith.cmpi eq, %2, %160 : vector<1x128xi32>
    %cst_62 = arith.constant 0.000000e+00 : f32
    %162 = vector.broadcast %cst_62 : f32 to vector<1x128xf32>
    %163 = arith.select %161, %159, %162 : vector<1x128xi1>, vector<1x128xf32>
    %cst_63 = arith.constant dense<0.000000e+00> : vector<1xf32>
    %164 = vector.multi_reduction <add>, %163, %cst_63 [1] : vector<1x128xf32> to vector<1xf32>
    %165 = vector.shape_cast %164 : vector<1xf32> to vector<1x1xf32>
    %c5_i32_64 = arith.constant 5 : i32
    %166 = vector.broadcast %c5_i32_64 : i32 to vector<16x128xi32>
    %167 = arith.cmpi eq, %1, %166 : vector<16x128xi32>
    %cst_65 = arith.constant 0.000000e+00 : f32
    %168 = vector.broadcast %cst_65 : f32 to vector<16x128xf32>
    %169 = arith.select %167, %158, %168 : vector<16x128xi1>, vector<16x128xf32>
    %cst_66 = arith.constant dense<0.000000e+00> : vector<16xf32>
    %170 = vector.multi_reduction <add>, %169, %cst_66 [1] : vector<16x128xf32> to vector<16xf32>
    %171 = vector.shape_cast %170 : vector<16xf32> to vector<16x1xf32>
    %172 = tpu.reciprocal %165 {approx = true} : vector<1x1xf32> -> vector<1x1xf32>
    %173 = arith.mulf %165, %172 : vector<1x1xf32>
    %cst_67 = arith.constant 2.000000e+00 : f32
    %174 = vector.broadcast %cst_67 : f32 to vector<1x1xf32>
    %175 = arith.subf %174, %173 : vector<1x1xf32>
    %176 = arith.mulf %172, %175 : vector<1x1xf32>
    %c5_i32_68 = arith.constant 5 : i32
    %177 = vector.broadcast %c5_i32_68 : i32 to vector<16x1xi32>
    %178 = arith.cmpi eq, %0, %177 : vector<16x1xi32>
    %179 = arith.extui %178 : vector<16x1xi1> to vector<16x1xi32>
    %180 = arith.sitofp %179 : vector<16x1xi32> to vector<16x1xf32>
    %181 = arith.subf %171, %180 : vector<16x1xf32>
    %182 = vector.broadcast %176 : vector<1x1xf32> to vector<1x128xf32>
    %183 = arith.mulf %159, %182 : vector<1x128xf32>
    %184 = vector.broadcast %181 : vector<16x1xf32> to vector<16x128xf32>
    %185 = vector.broadcast %183 : vector<1x128xf32> to vector<16x128xf32>
    %186 = arith.mulf %184, %185 : vector<16x128xf32>
    %187 = arith.subf %158, %186 : vector<16x128xf32>
    %c0_69 = arith.constant 0 : index
    %c0_70 = arith.constant 0 : index
    %188 = vector.load %arg0[%c0_69, %c0_70] : memref<16x128xf32, #tpu.memory_space<vmem>>, vector<16x128xf32>
    tpu.vector_store %arg0[%c0_69, %c0_70], %187 {strides = array<i32>} : memref<16x128xf32, #tpu.memory_space<vmem>>, vector<16x128xf32>,
    %c0_71 = arith.constant 0 : index
    %c0_72 = arith.constant 0 : index
    %189 = vector.load %arg0[%c0_71, %c0_72] : memref<16x128xf32, #tpu.memory_space<vmem>>, vector<16x128xf32>
    %c6 = arith.constant 6 : index
    %c0_73 = arith.constant 0 : index
    %190 = vector.load %arg0[%c6, %c0_73] : memref<16x128xf32, #tpu.memory_space<vmem>>, vector<1x128xf32>
    %c6_i32 = arith.constant 6 : i32
    %191 = vector.broadcast %c6_i32 : i32 to vector<1x128xi32>
    %192 = arith.cmpi eq, %2, %191 : vector<1x128xi32>
    %cst_74 = arith.constant 0.000000e+00 : f32
    %193 = vector.broadcast %cst_74 : f32 to vector<1x128xf32>
    %194 = arith.select %192, %190, %193 : vector<1x128xi1>, vector<1x128xf32>
    %cst_75 = arith.constant dense<0.000000e+00> : vector<1xf32>
    %195 = vector.multi_reduction <add>, %194, %cst_75 [1] : vector<1x128xf32> to vector<1xf32>
    %196 = vector.shape_cast %195 : vector<1xf32> to vector<1x1xf32>
    %c6_i32_76 = arith.constant 6 : i32
    %197 = vector.broadcast %c6_i32_76 : i32 to vector<16x128xi32>
    %198 = arith.cmpi eq, %1, %197 : vector<16x128xi32>
    %cst_77 = arith.constant 0.000000e+00 : f32
    %199 = vector.broadcast %cst_77 : f32 to vector<16x128xf32>
    %200 = arith.select %198, %189, %199 : vector<16x128xi1>, vector<16x128xf32>
    %cst_78 = arith.constant dense<0.000000e+00> : vector<16xf32>
    %201 = vector.multi_reduction <add>, %200, %cst_78 [1] : vector<16x128xf32> to vector<16xf32>
    %202 = vector.shape_cast %201 : vector<16xf32> to vector<16x1xf32>
    %203 = tpu.reciprocal %196 {approx = true} : vector<1x1xf32> -> vector<1x1xf32>
    %204 = arith.mulf %196, %203 : vector<1x1xf32>
    %cst_79 = arith.constant 2.000000e+00 : f32
    %205 = vector.broadcast %cst_79 : f32 to vector<1x1xf32>
    %206 = arith.subf %205, %204 : vector<1x1xf32>
    %207 = arith.mulf %203, %206 : vector<1x1xf32>
    %c6_i32_80 = arith.constant 6 : i32
    %208 = vector.broadcast %c6_i32_80 : i32 to vector<16x1xi32>
    %209 = arith.cmpi eq, %0, %208 : vector<16x1xi32>
    %210 = arith.extui %209 : vector<16x1xi1> to vector<16x1xi32>
    %211 = arith.sitofp %210 : vector<16x1xi32> to vector<16x1xf32>
    %212 = arith.subf %202, %211 : vector<16x1xf32>
    %213 = vector.broadcast %207 : vector<1x1xf32> to vector<1x128xf32>
    %214 = arith.mulf %190, %213 : vector<1x128xf32>
    %215 = vector.broadcast %212 : vector<16x1xf32> to vector<16x128xf32>
    %216 = vector.broadcast %214 : vector<1x128xf32> to vector<16x128xf32>
    %217 = arith.mulf %215, %216 : vector<16x128xf32>
    %218 = arith.subf %189, %217 : vector<16x128xf32>
    %c0_81 = arith.constant 0 : index
    %c0_82 = arith.constant 0 : index
    %219 = vector.load %arg0[%c0_81, %c0_82] : memref<16x128xf32, #tpu.memory_space<vmem>>, vector<16x128xf32>
    tpu.vector_store %arg0[%c0_81, %c0_82], %218 {strides = array<i32>} : memref<16x128xf32, #tpu.memory_space<vmem>>, vector<16x128xf32>,
    %c0_83 = arith.constant 0 : index
    %c0_84 = arith.constant 0 : index
    %220 = vector.load %arg0[%c0_83, %c0_84] : memref<16x128xf32, #tpu.memory_space<vmem>>, vector<16x128xf32>
    %c7 = arith.constant 7 : index
    %c0_85 = arith.constant 0 : index
    %221 = vector.load %arg0[%c7, %c0_85] : memref<16x128xf32, #tpu.memory_space<vmem>>, vector<1x128xf32>
    %c7_i32 = arith.constant 7 : i32
    %222 = vector.broadcast %c7_i32 : i32 to vector<1x128xi32>
    %223 = arith.cmpi eq, %2, %222 : vector<1x128xi32>
    %cst_86 = arith.constant 0.000000e+00 : f32
    %224 = vector.broadcast %cst_86 : f32 to vector<1x128xf32>
    %225 = arith.select %223, %221, %224 : vector<1x128xi1>, vector<1x128xf32>
    %cst_87 = arith.constant dense<0.000000e+00> : vector<1xf32>
    %226 = vector.multi_reduction <add>, %225, %cst_87 [1] : vector<1x128xf32> to vector<1xf32>
    %227 = vector.shape_cast %226 : vector<1xf32> to vector<1x1xf32>
    %c7_i32_88 = arith.constant 7 : i32
    %228 = vector.broadcast %c7_i32_88 : i32 to vector<16x128xi32>
    %229 = arith.cmpi eq, %1, %228 : vector<16x128xi32>
    %cst_89 = arith.constant 0.000000e+00 : f32
    %230 = vector.broadcast %cst_89 : f32 to vector<16x128xf32>
    %231 = arith.select %229, %220, %230 : vector<16x128xi1>, vector<16x128xf32>
    %cst_90 = arith.constant dense<0.000000e+00> : vector<16xf32>
    %232 = vector.multi_reduction <add>, %231, %cst_90 [1] : vector<16x128xf32> to vector<16xf32>
    %233 = vector.shape_cast %232 : vector<16xf32> to vector<16x1xf32>
    %234 = tpu.reciprocal %227 {approx = true} : vector<1x1xf32> -> vector<1x1xf32>
    %235 = arith.mulf %227, %234 : vector<1x1xf32>
    %cst_91 = arith.constant 2.000000e+00 : f32
    %236 = vector.broadcast %cst_91 : f32 to vector<1x1xf32>
    %237 = arith.subf %236, %235 : vector<1x1xf32>
    %238 = arith.mulf %234, %237 : vector<1x1xf32>
    %c7_i32_92 = arith.constant 7 : i32
    %239 = vector.broadcast %c7_i32_92 : i32 to vector<16x1xi32>
    %240 = arith.cmpi eq, %0, %239 : vector<16x1xi32>
    %241 = arith.extui %240 : vector<16x1xi1> to vector<16x1xi32>
    %242 = arith.sitofp %241 : vector<16x1xi32> to vector<16x1xf32>
    %243 = arith.subf %233, %242 : vector<16x1xf32>
    %244 = vector.broadcast %238 : vector<1x1xf32> to vector<1x128xf32>
    %245 = arith.mulf %221, %244 : vector<1x128xf32>
    %246 = vector.broadcast %243 : vector<16x1xf32> to vector<16x128xf32>
    %247 = vector.broadcast %245 : vector<1x128xf32> to vector<16x128xf32>
    %248 = arith.mulf %246, %247 : vector<16x128xf32>
    %249 = arith.subf %220, %248 : vector<16x128xf32>
    %c0_93 = arith.constant 0 : index
    %c0_94 = arith.constant 0 : index
    %250 = vector.load %arg0[%c0_93, %c0_94] : memref<16x128xf32, #tpu.memory_space<vmem>>, vector<16x128xf32>
    tpu.vector_store %arg0[%c0_93, %c0_94], %249 {strides = array<i32>} : memref<16x128xf32, #tpu.memory_space<vmem>>, vector<16x128xf32>,
    %c0_95 = arith.constant 0 : index
    %c0_96 = arith.constant 0 : index
    %251 = vector.load %arg0[%c0_95, %c0_96] : memref<16x128xf32, #tpu.memory_space<vmem>>, vector<16x128xf32>
    %c8 = arith.constant 8 : index
    %c0_97 = arith.constant 0 : index
    %252 = vector.load %arg0[%c8, %c0_97] : memref<16x128xf32, #tpu.memory_space<vmem>>, vector<1x128xf32>
    %c8_i32 = arith.constant 8 : i32
    %253 = vector.broadcast %c8_i32 : i32 to vector<1x128xi32>
    %254 = arith.cmpi eq, %2, %253 : vector<1x128xi32>
    %cst_98 = arith.constant 0.000000e+00 : f32
    %255 = vector.broadcast %cst_98 : f32 to vector<1x128xf32>
    %256 = arith.select %254, %252, %255 : vector<1x128xi1>, vector<1x128xf32>
    %cst_99 = arith.constant dense<0.000000e+00> : vector<1xf32>
    %257 = vector.multi_reduction <add>, %256, %cst_99 [1] : vector<1x128xf32> to vector<1xf32>
    %258 = vector.shape_cast %257 : vector<1xf32> to vector<1x1xf32>
    %c8_i32_100 = arith.constant 8 : i32
    %259 = vector.broadcast %c8_i32_100 : i32 to vector<16x128xi32>
    %260 = arith.cmpi eq, %1, %259 : vector<16x128xi32>
    %cst_101 = arith.constant 0.000000e+00 : f32
    %261 = vector.broadcast %cst_101 : f32 to vector<16x128xf32>
    %262 = arith.select %260, %251, %261 : vector<16x128xi1>, vector<16x128xf32>
    %cst_102 = arith.constant dense<0.000000e+00> : vector<16xf32>
    %263 = vector.multi_reduction <add>, %262, %cst_102 [1] : vector<16x128xf32> to vector<16xf32>
    %264 = vector.shape_cast %263 : vector<16xf32> to vector<16x1xf32>
    %265 = tpu.reciprocal %258 {approx = true} : vector<1x1xf32> -> vector<1x1xf32>
    %266 = arith.mulf %258, %265 : vector<1x1xf32>
    %cst_103 = arith.constant 2.000000e+00 : f32
    %267 = vector.broadcast %cst_103 : f32 to vector<1x1xf32>
    %268 = arith.subf %267, %266 : vector<1x1xf32>
    %269 = arith.mulf %265, %268 : vector<1x1xf32>
    %c8_i32_104 = arith.constant 8 : i32
    %270 = vector.broadcast %c8_i32_104 : i32 to vector<16x1xi32>
    %271 = arith.cmpi eq, %0, %270 : vector<16x1xi32>
    %272 = arith.extui %271 : vector<16x1xi1> to vector<16x1xi32>
    %273 = arith.sitofp %272 : vector<16x1xi32> to vector<16x1xf32>
    %274 = arith.subf %264, %273 : vector<16x1xf32>
    %275 = vector.broadcast %269 : vector<1x1xf32> to vector<1x128xf32>
    %276 = arith.mulf %252, %275 : vector<1x128xf32>
    %277 = vector.broadcast %274 : vector<16x1xf32> to vector<16x128xf32>
    %278 = vector.broadcast %276 : vector<1x128xf32> to vector<16x128xf32>
    %279 = arith.mulf %277, %278 : vector<16x128xf32>
    %280 = arith.subf %251, %279 : vector<16x128xf32>
    %c0_105 = arith.constant 0 : index
    %c0_106 = arith.constant 0 : index
    %281 = vector.load %arg0[%c0_105, %c0_106] : memref<16x128xf32, #tpu.memory_space<vmem>>, vector<16x128xf32>
    tpu.vector_store %arg0[%c0_105, %c0_106], %280 {strides = array<i32>} : memref<16x128xf32, #tpu.memory_space<vmem>>, vector<16x128xf32>,
    %c0_107 = arith.constant 0 : index
    %c0_108 = arith.constant 0 : index
    %282 = vector.load %arg0[%c0_107, %c0_108] : memref<16x128xf32, #tpu.memory_space<vmem>>, vector<16x128xf32>
    %c9 = arith.constant 9 : index
    %c0_109 = arith.constant 0 : index
    %283 = vector.load %arg0[%c9, %c0_109] : memref<16x128xf32, #tpu.memory_space<vmem>>, vector<1x128xf32>
    %c9_i32 = arith.constant 9 : i32
    %284 = vector.broadcast %c9_i32 : i32 to vector<1x128xi32>
    %285 = arith.cmpi eq, %2, %284 : vector<1x128xi32>
    %cst_110 = arith.constant 0.000000e+00 : f32
    %286 = vector.broadcast %cst_110 : f32 to vector<1x128xf32>
    %287 = arith.select %285, %283, %286 : vector<1x128xi1>, vector<1x128xf32>
    %cst_111 = arith.constant dense<0.000000e+00> : vector<1xf32>
    %288 = vector.multi_reduction <add>, %287, %cst_111 [1] : vector<1x128xf32> to vector<1xf32>
    %289 = vector.shape_cast %288 : vector<1xf32> to vector<1x1xf32>
    %c9_i32_112 = arith.constant 9 : i32
    %290 = vector.broadcast %c9_i32_112 : i32 to vector<16x128xi32>
    %291 = arith.cmpi eq, %1, %290 : vector<16x128xi32>
    %cst_113 = arith.constant 0.000000e+00 : f32
    %292 = vector.broadcast %cst_113 : f32 to vector<16x128xf32>
    %293 = arith.select %291, %282, %292 : vector<16x128xi1>, vector<16x128xf32>
    %cst_114 = arith.constant dense<0.000000e+00> : vector<16xf32>
    %294 = vector.multi_reduction <add>, %293, %cst_114 [1] : vector<16x128xf32> to vector<16xf32>
    %295 = vector.shape_cast %294 : vector<16xf32> to vector<16x1xf32>
    %296 = tpu.reciprocal %289 {approx = true} : vector<1x1xf32> -> vector<1x1xf32>
    %297 = arith.mulf %289, %296 : vector<1x1xf32>
    %cst_115 = arith.constant 2.000000e+00 : f32
    %298 = vector.broadcast %cst_115 : f32 to vector<1x1xf32>
    %299 = arith.subf %298, %297 : vector<1x1xf32>
    %300 = arith.mulf %296, %299 : vector<1x1xf32>
    %c9_i32_116 = arith.constant 9 : i32
    %301 = vector.broadcast %c9_i32_116 : i32 to vector<16x1xi32>
    %302 = arith.cmpi eq, %0, %301 : vector<16x1xi32>
    %303 = arith.extui %302 : vector<16x1xi1> to vector<16x1xi32>
    %304 = arith.sitofp %303 : vector<16x1xi32> to vector<16x1xf32>
    %305 = arith.subf %295, %304 : vector<16x1xf32>
    %306 = vector.broadcast %300 : vector<1x1xf32> to vector<1x128xf32>
    %307 = arith.mulf %283, %306 : vector<1x128xf32>
    %308 = vector.broadcast %305 : vector<16x1xf32> to vector<16x128xf32>
    %309 = vector.broadcast %307 : vector<1x128xf32> to vector<16x128xf32>
    %310 = arith.mulf %308, %309 : vector<16x128xf32>
    %311 = arith.subf %282, %310 : vector<16x128xf32>
    %c0_117 = arith.constant 0 : index
    %c0_118 = arith.constant 0 : index
    %312 = vector.load %arg0[%c0_117, %c0_118] : memref<16x128xf32, #tpu.memory_space<vmem>>, vector<16x128xf32>
    tpu.vector_store %arg0[%c0_117, %c0_118], %311 {strides = array<i32>} : memref<16x128xf32, #tpu.memory_space<vmem>>, vector<16x128xf32>,
    %c0_119 = arith.constant 0 : index
    %c0_120 = arith.constant 0 : index
    %313 = vector.load %arg0[%c0_119, %c0_120] : memref<16x128xf32, #tpu.memory_space<vmem>>, vector<16x128xf32>
    %c10 = arith.constant 10 : index
    %c0_121 = arith.constant 0 : index
    %314 = vector.load %arg0[%c10, %c0_121] : memref<16x128xf32, #tpu.memory_space<vmem>>, vector<1x128xf32>
    %c10_i32 = arith.constant 10 : i32
    %315 = vector.broadcast %c10_i32 : i32 to vector<1x128xi32>
    %316 = arith.cmpi eq, %2, %315 : vector<1x128xi32>
    %cst_122 = arith.constant 0.000000e+00 : f32
    %317 = vector.broadcast %cst_122 : f32 to vector<1x128xf32>
    %318 = arith.select %316, %314, %317 : vector<1x128xi1>, vector<1x128xf32>
    %cst_123 = arith.constant dense<0.000000e+00> : vector<1xf32>
    %319 = vector.multi_reduction <add>, %318, %cst_123 [1] : vector<1x128xf32> to vector<1xf32>
    %320 = vector.shape_cast %319 : vector<1xf32> to vector<1x1xf32>
    %c10_i32_124 = arith.constant 10 : i32
    %321 = vector.broadcast %c10_i32_124 : i32 to vector<16x128xi32>
    %322 = arith.cmpi eq, %1, %321 : vector<16x128xi32>
    %cst_125 = arith.constant 0.000000e+00 : f32
    %323 = vector.broadcast %cst_125 : f32 to vector<16x128xf32>
    %324 = arith.select %322, %313, %323 : vector<16x128xi1>, vector<16x128xf32>
    %cst_126 = arith.constant dense<0.000000e+00> : vector<16xf32>
    %325 = vector.multi_reduction <add>, %324, %cst_126 [1] : vector<16x128xf32> to vector<16xf32>
    %326 = vector.shape_cast %325 : vector<16xf32> to vector<16x1xf32>
    %327 = tpu.reciprocal %320 {approx = true} : vector<1x1xf32> -> vector<1x1xf32>
    %328 = arith.mulf %320, %327 : vector<1x1xf32>
    %cst_127 = arith.constant 2.000000e+00 : f32
    %329 = vector.broadcast %cst_127 : f32 to vector<1x1xf32>
    %330 = arith.subf %329, %328 : vector<1x1xf32>
    %331 = arith.mulf %327, %330 : vector<1x1xf32>
    %c10_i32_128 = arith.constant 10 : i32
    %332 = vector.broadcast %c10_i32_128 : i32 to vector<16x1xi32>
    %333 = arith.cmpi eq, %0, %332 : vector<16x1xi32>
    %334 = arith.extui %333 : vector<16x1xi1> to vector<16x1xi32>
    %335 = arith.sitofp %334 : vector<16x1xi32> to vector<16x1xf32>
    %336 = arith.subf %326, %335 : vector<16x1xf32>
    %337 = vector.broadcast %331 : vector<1x1xf32> to vector<1x128xf32>
    %338 = arith.mulf %314, %337 : vector<1x128xf32>
    %339 = vector.broadcast %336 : vector<16x1xf32> to vector<16x128xf32>
    %340 = vector.broadcast %338 : vector<1x128xf32> to vector<16x128xf32>
    %341 = arith.mulf %339, %340 : vector<16x128xf32>
    %342 = arith.subf %313, %341 : vector<16x128xf32>
    %c0_129 = arith.constant 0 : index
    %c0_130 = arith.constant 0 : index
    %343 = vector.load %arg0[%c0_129, %c0_130] : memref<16x128xf32, #tpu.memory_space<vmem>>, vector<16x128xf32>
    tpu.vector_store %arg0[%c0_129, %c0_130], %342 {strides = array<i32>} : memref<16x128xf32, #tpu.memory_space<vmem>>, vector<16x128xf32>,
    %c0_131 = arith.constant 0 : index
    %c0_132 = arith.constant 0 : index
    %344 = vector.load %arg0[%c0_131, %c0_132] : memref<16x128xf32, #tpu.memory_space<vmem>>, vector<16x128xf32>
    %c11 = arith.constant 11 : index
    %c0_133 = arith.constant 0 : index
    %345 = vector.load %arg0[%c11, %c0_133] : memref<16x128xf32, #tpu.memory_space<vmem>>, vector<1x128xf32>
    %c11_i32 = arith.constant 11 : i32
    %346 = vector.broadcast %c11_i32 : i32 to vector<1x128xi32>
    %347 = arith.cmpi eq, %2, %346 : vector<1x128xi32>
    %cst_134 = arith.constant 0.000000e+00 : f32
    %348 = vector.broadcast %cst_134 : f32 to vector<1x128xf32>
    %349 = arith.select %347, %345, %348 : vector<1x128xi1>, vector<1x128xf32>
    %cst_135 = arith.constant dense<0.000000e+00> : vector<1xf32>
    %350 = vector.multi_reduction <add>, %349, %cst_135 [1] : vector<1x128xf32> to vector<1xf32>
    %351 = vector.shape_cast %350 : vector<1xf32> to vector<1x1xf32>
    %c11_i32_136 = arith.constant 11 : i32
    %352 = vector.broadcast %c11_i32_136 : i32 to vector<16x128xi32>
    %353 = arith.cmpi eq, %1, %352 : vector<16x128xi32>
    %cst_137 = arith.constant 0.000000e+00 : f32
    %354 = vector.broadcast %cst_137 : f32 to vector<16x128xf32>
    %355 = arith.select %353, %344, %354 : vector<16x128xi1>, vector<16x128xf32>
    %cst_138 = arith.constant dense<0.000000e+00> : vector<16xf32>
    %356 = vector.multi_reduction <add>, %355, %cst_138 [1] : vector<16x128xf32> to vector<16xf32>
    %357 = vector.shape_cast %356 : vector<16xf32> to vector<16x1xf32>
    %358 = tpu.reciprocal %351 {approx = true} : vector<1x1xf32> -> vector<1x1xf32>
    %359 = arith.mulf %351, %358 : vector<1x1xf32>
    %cst_139 = arith.constant 2.000000e+00 : f32
    %360 = vector.broadcast %cst_139 : f32 to vector<1x1xf32>
    %361 = arith.subf %360, %359 : vector<1x1xf32>
    %362 = arith.mulf %358, %361 : vector<1x1xf32>
    %c11_i32_140 = arith.constant 11 : i32
    %363 = vector.broadcast %c11_i32_140 : i32 to vector<16x1xi32>
    %364 = arith.cmpi eq, %0, %363 : vector<16x1xi32>
    %365 = arith.extui %364 : vector<16x1xi1> to vector<16x1xi32>
    %366 = arith.sitofp %365 : vector<16x1xi32> to vector<16x1xf32>
    %367 = arith.subf %357, %366 : vector<16x1xf32>
    %368 = vector.broadcast %362 : vector<1x1xf32> to vector<1x128xf32>
    %369 = arith.mulf %345, %368 : vector<1x128xf32>
    %370 = vector.broadcast %367 : vector<16x1xf32> to vector<16x128xf32>
    %371 = vector.broadcast %369 : vector<1x128xf32> to vector<16x128xf32>
    %372 = arith.mulf %370, %371 : vector<16x128xf32>
    %373 = arith.subf %344, %372 : vector<16x128xf32>
    %c0_141 = arith.constant 0 : index
    %c0_142 = arith.constant 0 : index
    %374 = vector.load %arg0[%c0_141, %c0_142] : memref<16x128xf32, #tpu.memory_space<vmem>>, vector<16x128xf32>
    tpu.vector_store %arg0[%c0_141, %c0_142], %373 {strides = array<i32>} : memref<16x128xf32, #tpu.memory_space<vmem>>, vector<16x128xf32>,
    %c0_143 = arith.constant 0 : index
    %c0_144 = arith.constant 0 : index
    %375 = vector.load %arg0[%c0_143, %c0_144] : memref<16x128xf32, #tpu.memory_space<vmem>>, vector<16x128xf32>
    %c12 = arith.constant 12 : index
    %c0_145 = arith.constant 0 : index
    %376 = vector.load %arg0[%c12, %c0_145] : memref<16x128xf32, #tpu.memory_space<vmem>>, vector<1x128xf32>
    %c12_i32 = arith.constant 12 : i32
    %377 = vector.broadcast %c12_i32 : i32 to vector<1x128xi32>
    %378 = arith.cmpi eq, %2, %377 : vector<1x128xi32>
    %cst_146 = arith.constant 0.000000e+00 : f32
    %379 = vector.broadcast %cst_146 : f32 to vector<1x128xf32>
    %380 = arith.select %378, %376, %379 : vector<1x128xi1>, vector<1x128xf32>
    %cst_147 = arith.constant dense<0.000000e+00> : vector<1xf32>
    %381 = vector.multi_reduction <add>, %380, %cst_147 [1] : vector<1x128xf32> to vector<1xf32>
    %382 = vector.shape_cast %381 : vector<1xf32> to vector<1x1xf32>
    %c12_i32_148 = arith.constant 12 : i32
    %383 = vector.broadcast %c12_i32_148 : i32 to vector<16x128xi32>
    %384 = arith.cmpi eq, %1, %383 : vector<16x128xi32>
    %cst_149 = arith.constant 0.000000e+00 : f32
    %385 = vector.broadcast %cst_149 : f32 to vector<16x128xf32>
    %386 = arith.select %384, %375, %385 : vector<16x128xi1>, vector<16x128xf32>
    %cst_150 = arith.constant dense<0.000000e+00> : vector<16xf32>
    %387 = vector.multi_reduction <add>, %386, %cst_150 [1] : vector<16x128xf32> to vector<16xf32>
    %388 = vector.shape_cast %387 : vector<16xf32> to vector<16x1xf32>
    %389 = tpu.reciprocal %382 {approx = true} : vector<1x1xf32> -> vector<1x1xf32>
    %390 = arith.mulf %382, %389 : vector<1x1xf32>
    %cst_151 = arith.constant 2.000000e+00 : f32
    %391 = vector.broadcast %cst_151 : f32 to vector<1x1xf32>
    %392 = arith.subf %391, %390 : vector<1x1xf32>
    %393 = arith.mulf %389, %392 : vector<1x1xf32>
    %c12_i32_152 = arith.constant 12 : i32
    %394 = vector.broadcast %c12_i32_152 : i32 to vector<16x1xi32>
    %395 = arith.cmpi eq, %0, %394 : vector<16x1xi32>
    %396 = arith.extui %395 : vector<16x1xi1> to vector<16x1xi32>
    %397 = arith.sitofp %396 : vector<16x1xi32> to vector<16x1xf32>
    %398 = arith.subf %388, %397 : vector<16x1xf32>
    %399 = vector.broadcast %393 : vector<1x1xf32> to vector<1x128xf32>
    %400 = arith.mulf %376, %399 : vector<1x128xf32>
    %401 = vector.broadcast %398 : vector<16x1xf32> to vector<16x128xf32>
    %402 = vector.broadcast %400 : vector<1x128xf32> to vector<16x128xf32>
    %403 = arith.mulf %401, %402 : vector<16x128xf32>
    %404 = arith.subf %375, %403 : vector<16x128xf32>
    %c0_153 = arith.constant 0 : index
    %c0_154 = arith.constant 0 : index
    %405 = vector.load %arg0[%c0_153, %c0_154] : memref<16x128xf32, #tpu.memory_space<vmem>>, vector<16x128xf32>
    tpu.vector_store %arg0[%c0_153, %c0_154], %404 {strides = array<i32>} : memref<16x128xf32, #tpu.memory_space<vmem>>, vector<16x128xf32>,
    %c0_155 = arith.constant 0 : index
    %c0_156 = arith.constant 0 : index
    %406 = vector.load %arg0[%c0_155, %c0_156] : memref<16x128xf32, #tpu.memory_space<vmem>>, vector<16x128xf32>
    %c13 = arith.constant 13 : index
    %c0_157 = arith.constant 0 : index
    %407 = vector.load %arg0[%c13, %c0_157] : memref<16x128xf32, #tpu.memory_space<vmem>>, vector<1x128xf32>
    %c13_i32 = arith.constant 13 : i32
    %408 = vector.broadcast %c13_i32 : i32 to vector<1x128xi32>
    %409 = arith.cmpi eq, %2, %408 : vector<1x128xi32>
    %cst_158 = arith.constant 0.000000e+00 : f32
    %410 = vector.broadcast %cst_158 : f32 to vector<1x128xf32>
    %411 = arith.select %409, %407, %410 : vector<1x128xi1>, vector<1x128xf32>
    %cst_159 = arith.constant dense<0.000000e+00> : vector<1xf32>
    %412 = vector.multi_reduction <add>, %411, %cst_159 [1] : vector<1x128xf32> to vector<1xf32>
    %413 = vector.shape_cast %412 : vector<1xf32> to vector<1x1xf32>
    %c13_i32_160 = arith.constant 13 : i32
    %414 = vector.broadcast %c13_i32_160 : i32 to vector<16x128xi32>
    %415 = arith.cmpi eq, %1, %414 : vector<16x128xi32>
    %cst_161 = arith.constant 0.000000e+00 : f32
    %416 = vector.broadcast %cst_161 : f32 to vector<16x128xf32>
    %417 = arith.select %415, %406, %416 : vector<16x128xi1>, vector<16x128xf32>
    %cst_162 = arith.constant dense<0.000000e+00> : vector<16xf32>
    %418 = vector.multi_reduction <add>, %417, %cst_162 [1] : vector<16x128xf32> to vector<16xf32>
    %419 = vector.shape_cast %418 : vector<16xf32> to vector<16x1xf32>
    %420 = tpu.reciprocal %413 {approx = true} : vector<1x1xf32> -> vector<1x1xf32>
    %421 = arith.mulf %413, %420 : vector<1x1xf32>
    %cst_163 = arith.constant 2.000000e+00 : f32
    %422 = vector.broadcast %cst_163 : f32 to vector<1x1xf32>
    %423 = arith.subf %422, %421 : vector<1x1xf32>
    %424 = arith.mulf %420, %423 : vector<1x1xf32>
    %c13_i32_164 = arith.constant 13 : i32
    %425 = vector.broadcast %c13_i32_164 : i32 to vector<16x1xi32>
    %426 = arith.cmpi eq, %0, %425 : vector<16x1xi32>
    %427 = arith.extui %426 : vector<16x1xi1> to vector<16x1xi32>
    %428 = arith.sitofp %427 : vector<16x1xi32> to vector<16x1xf32>
    %429 = arith.subf %419, %428 : vector<16x1xf32>
    %430 = vector.broadcast %424 : vector<1x1xf32> to vector<1x128xf32>
    %431 = arith.mulf %407, %430 : vector<1x128xf32>
    %432 = vector.broadcast %429 : vector<16x1xf32> to vector<16x128xf32>
    %433 = vector.broadcast %431 : vector<1x128xf32> to vector<16x128xf32>
    %434 = arith.mulf %432, %433 : vector<16x128xf32>
    %435 = arith.subf %406, %434 : vector<16x128xf32>
    %c0_165 = arith.constant 0 : index
    %c0_166 = arith.constant 0 : index
    %436 = vector.load %arg0[%c0_165, %c0_166] : memref<16x128xf32, #tpu.memory_space<vmem>>, vector<16x128xf32>
    tpu.vector_store %arg0[%c0_165, %c0_166], %435 {strides = array<i32>} : memref<16x128xf32, #tpu.memory_space<vmem>>, vector<16x128xf32>,
    %c0_167 = arith.constant 0 : index
    %c0_168 = arith.constant 0 : index
    %437 = vector.load %arg0[%c0_167, %c0_168] : memref<16x128xf32, #tpu.memory_space<vmem>>, vector<16x128xf32>
    %c14 = arith.constant 14 : index
    %c0_169 = arith.constant 0 : index
    %438 = vector.load %arg0[%c14, %c0_169] : memref<16x128xf32, #tpu.memory_space<vmem>>, vector<1x128xf32>
    %c14_i32 = arith.constant 14 : i32
    %439 = vector.broadcast %c14_i32 : i32 to vector<1x128xi32>
    %440 = arith.cmpi eq, %2, %439 : vector<1x128xi32>
    %cst_170 = arith.constant 0.000000e+00 : f32
    %441 = vector.broadcast %cst_170 : f32 to vector<1x128xf32>
    %442 = arith.select %440, %438, %441 : vector<1x128xi1>, vector<1x128xf32>
    %cst_171 = arith.constant dense<0.000000e+00> : vector<1xf32>
    %443 = vector.multi_reduction <add>, %442, %cst_171 [1] : vector<1x128xf32> to vector<1xf32>
    %444 = vector.shape_cast %443 : vector<1xf32> to vector<1x1xf32>
    %c14_i32_172 = arith.constant 14 : i32
    %445 = vector.broadcast %c14_i32_172 : i32 to vector<16x128xi32>
    %446 = arith.cmpi eq, %1, %445 : vector<16x128xi32>
    %cst_173 = arith.constant 0.000000e+00 : f32
    %447 = vector.broadcast %cst_173 : f32 to vector<16x128xf32>
    %448 = arith.select %446, %437, %447 : vector<16x128xi1>, vector<16x128xf32>
    %cst_174 = arith.constant dense<0.000000e+00> : vector<16xf32>
    %449 = vector.multi_reduction <add>, %448, %cst_174 [1] : vector<16x128xf32> to vector<16xf32>
    %450 = vector.shape_cast %449 : vector<16xf32> to vector<16x1xf32>
    %451 = tpu.reciprocal %444 {approx = true} : vector<1x1xf32> -> vector<1x1xf32>
    %452 = arith.mulf %444, %451 : vector<1x1xf32>
    %cst_175 = arith.constant 2.000000e+00 : f32
    %453 = vector.broadcast %cst_175 : f32 to vector<1x1xf32>
    %454 = arith.subf %453, %452 : vector<1x1xf32>
    %455 = arith.mulf %451, %454 : vector<1x1xf32>
    %c14_i32_176 = arith.constant 14 : i32
    %456 = vector.broadcast %c14_i32_176 : i32 to vector<16x1xi32>
    %457 = arith.cmpi eq, %0, %456 : vector<16x1xi32>
    %458 = arith.extui %457 : vector<16x1xi1> to vector<16x1xi32>
    %459 = arith.sitofp %458 : vector<16x1xi32> to vector<16x1xf32>
    %460 = arith.subf %450, %459 : vector<16x1xf32>
    %461 = vector.broadcast %455 : vector<1x1xf32> to vector<1x128xf32>
    %462 = arith.mulf %438, %461 : vector<1x128xf32>
    %463 = vector.broadcast %460 : vector<16x1xf32> to vector<16x128xf32>
    %464 = vector.broadcast %462 : vector<1x128xf32> to vector<16x128xf32>
    %465 = arith.mulf %463, %464 : vector<16x128xf32>
    %466 = arith.subf %437, %465 : vector<16x128xf32>
    %c0_177 = arith.constant 0 : index
    %c0_178 = arith.constant 0 : index
    %467 = vector.load %arg0[%c0_177, %c0_178] : memref<16x128xf32, #tpu.memory_space<vmem>>, vector<16x128xf32>
    tpu.vector_store %arg0[%c0_177, %c0_178], %466 {strides = array<i32>} : memref<16x128xf32, #tpu.memory_space<vmem>>, vector<16x128xf32>,
    %c0_179 = arith.constant 0 : index
    %c0_180 = arith.constant 0 : index
    %468 = vector.load %arg0[%c0_179, %c0_180] : memref<16x128xf32, #tpu.memory_space<vmem>>, vector<16x128xf32>
    %c15 = arith.constant 15 : index
    %c0_181 = arith.constant 0 : index
    %469 = vector.load %arg0[%c15, %c0_181] : memref<16x128xf32, #tpu.memory_space<vmem>>, vector<1x128xf32>
    %c15_i32 = arith.constant 15 : i32
    %470 = vector.broadcast %c15_i32 : i32 to vector<1x128xi32>
    %471 = arith.cmpi eq, %2, %470 : vector<1x128xi32>
    %cst_182 = arith.constant 0.000000e+00 : f32
    %472 = vector.broadcast %cst_182 : f32 to vector<1x128xf32>
    %473 = arith.select %471, %469, %472 : vector<1x128xi1>, vector<1x128xf32>
    %cst_183 = arith.constant dense<0.000000e+00> : vector<1xf32>
    %474 = vector.multi_reduction <add>, %473, %cst_183 [1] : vector<1x128xf32> to vector<1xf32>
    %475 = vector.shape_cast %474 : vector<1xf32> to vector<1x1xf32>
    %c15_i32_184 = arith.constant 15 : i32
    %476 = vector.broadcast %c15_i32_184 : i32 to vector<16x128xi32>
    %477 = arith.cmpi eq, %1, %476 : vector<16x128xi32>
    %cst_185 = arith.constant 0.000000e+00 : f32
    %478 = vector.broadcast %cst_185 : f32 to vector<16x128xf32>
    %479 = arith.select %477, %468, %478 : vector<16x128xi1>, vector<16x128xf32>
    %cst_186 = arith.constant dense<0.000000e+00> : vector<16xf32>
    %480 = vector.multi_reduction <add>, %479, %cst_186 [1] : vector<16x128xf32> to vector<16xf32>
    %481 = vector.shape_cast %480 : vector<16xf32> to vector<16x1xf32>
    %482 = tpu.reciprocal %475 {approx = true} : vector<1x1xf32> -> vector<1x1xf32>
    %483 = arith.mulf %475, %482 : vector<1x1xf32>
    %cst_187 = arith.constant 2.000000e+00 : f32
    %484 = vector.broadcast %cst_187 : f32 to vector<1x1xf32>
    %485 = arith.subf %484, %483 : vector<1x1xf32>
    %486 = arith.mulf %482, %485 : vector<1x1xf32>
    %c15_i32_188 = arith.constant 15 : i32
    %487 = vector.broadcast %c15_i32_188 : i32 to vector<16x1xi32>
    %488 = arith.cmpi eq, %0, %487 : vector<16x1xi32>
    %489 = arith.extui %488 : vector<16x1xi1> to vector<16x1xi32>
    %490 = arith.sitofp %489 : vector<16x1xi32> to vector<16x1xf32>
    %491 = arith.subf %481, %490 : vector<16x1xf32>
    %492 = vector.broadcast %486 : vector<1x1xf32> to vector<1x128xf32>
    %493 = arith.mulf %469, %492 : vector<1x128xf32>
    %494 = vector.broadcast %491 : vector<16x1xf32> to vector<16x128xf32>
    %495 = vector.broadcast %493 : vector<1x128xf32> to vector<16x128xf32>
    %496 = arith.mulf %494, %495 : vector<16x128xf32>
    %497 = arith.subf %468, %496 : vector<16x128xf32>
    %c0_189 = arith.constant 0 : index
    %c0_190 = arith.constant 0 : index
    %498 = vector.load %arg0[%c0_189, %c0_190] : memref<16x128xf32, #tpu.memory_space<vmem>>, vector<16x128xf32>
    tpu.vector_store %arg0[%c0_189, %c0_190], %497 {strides = array<i32>} : memref<16x128xf32, #tpu.memory_space<vmem>>, vector<16x128xf32>,
    %c0_191 = arith.constant 0 : index
    %c0_192 = arith.constant 0 : index
    %499 = vector.load %arg0[%c0_191, %c0_192] : memref<16x128xf32, #tpu.memory_space<vmem>>, vector<16x128xf32>
    %c16_i32 = arith.constant 16 : i32
    %500 = vector.broadcast %c16_i32 : i32 to vector<1x128xi32>
    %501 = arith.cmpi eq, %2, %500 : vector<1x128xi32>
    %cst_193 = arith.constant 0.000000e+00 : f32
    %502 = vector.shape_cast %501 : vector<1x128xi1> to vector<1x128xi1>
    %503 = vector.broadcast %502 : vector<1x128xi1> to vector<16x128xi1>
    %504 = vector.broadcast %cst_193 : f32 to vector<16x128xf32>
    %505 = arith.select %503, %499, %504 : vector<16x128xi1>, vector<16x128xf32>
    %cst_194 = arith.constant dense<0.000000e+00> : vector<16xf32>
    %506 = vector.multi_reduction <add>, %505, %cst_194 [1] : vector<16x128xf32> to vector<16xf32>
    %507 = vector.shape_cast %506 : vector<16xf32> to vector<16x1xf32>
    %c0_195 = arith.constant 0 : index
    %c0_196 = arith.constant 0 : index
    %508 = vector.load %arg1[%c0_195, %c0_196] : memref<16x1xf32, #tpu.memory_space<vmem>>, vector<16x1xf32>
    %509 = arith.subf %507, %508 : vector<16x1xf32>
    %510 = arith.mulf %509, %509 : vector<16x1xf32>
    %511 = vector.shape_cast %510 : vector<16x1xf32> to vector<1x16x1xf32>
    %cst_197 = arith.constant dense<0.000000e+00> : vector<1xf32>
    %512 = vector.multi_reduction <add>, %511, %cst_197 [1, 2] : vector<1x16x1xf32> to vector<1xf32>
    %513 = vector.shape_cast %512 : vector<1xf32> to vector<1x1x1xf32>
    %514 = vector.extract %513[0, 0, 0] : f32 from vector<1x1x1xf32>
    %515 = vector.broadcast %514 : f32 to vector<1x1xf32>
    %cst_198 = arith.constant 1.600000e+01 : f32
    %516 = vector.broadcast %cst_198 : f32 to vector<1x1xf32>
    %517 = arith.divf %515, %516 : vector<1x1xf32>
    %c0_199 = arith.constant 0 : index
    %c0_200 = arith.constant 0 : index
    %518 = vector.load %arg2[%c0_199, %c0_200] : memref<1x1xf32, #tpu.memory_space<vmem>>, vector<1x1xf32>
    tpu.vector_store %arg2[%c0_199, %c0_200], %517 {strides = array<i32>} : memref<1x1xf32, #tpu.memory_space<vmem>>, vector<1x1xf32>,
    return
  }
}

</mosaic_0001>

<llo_original>
// kernel: tpu_custom_call.1
$region0: #{tpu_custom_call.1}
  #allocation0 [shape = 'u32[]', space=smem, size = 0x4, offset = 0x4, fixed_abs, tag = 'smem constant byte address 0x4 - core index']
  #allocation1 [shape = 'u32[72,128]{1,0:T(1,128)}', space=vmem, size = 0x9000, scoped, tag = 'internal scratch']
  %s0 = inlined_call_operand.vmem [shape: f32[16,128], index: 0, kind: input, shape index: {}]
  %s1 = inlined_call_operand.vmem [shape: f32[16,1], index: 1, kind: input, shape index: {}]
  %s2 = inlined_call_operand.hbm [shape: f32[1,1], index: 2, kind: output, shape index: {}]
  %s3 = sld [smem:[#allocation0]]
  $region18: #{tpu_custom_call.1} parent=0
    _
  %s5 = ssub.s32 1, %s3
  %s6 = scalar_select 0, %s5, %s3
  $region1: #{tpu_custom_call.1} parent=0
    #allocation2 [shape = 'u8[512]{0}', space=vmem, size = 0x400, scoped, tag = 'output window, operand 0, single buffered']
    #allocation3 [shape = 's32[1]{0}', space=sflag, size = 0x4, scoped, tag = 'scoped memory for tpu_custom_call.1']
    %7 = vsyncpa [#allocation3], 0
    // Predicated region
    $region2: #{tpu_custom_call.1} parent=1 // pred_check
      _
    $region3: #{tpu_custom_call.1} parent=1 // pred_check_branch
      %9 = sbr.rel (0) target = $region5
    $region4: #{tpu_custom_call.1} parent=1 // pred_region
      _
    $region5: #{tpu_custom_call.1} parent=1 // pred_fallthru
      _
    // Predicated region
    $region6: #{tpu_custom_call.1} parent=1 // pred_check
      _
    $region7: #{tpu_custom_call.1} parent=1 // pred_check_branch
      %11 = sbr.rel (0) target = $region9
    $region8: #{tpu_custom_call.1} parent=1 // pred_region
      _
    $region9: #{tpu_custom_call.1} parent=1 // pred_fallthru
      _
    %v12 = vlaneseq
    %v13 = vshrl.u32 %v12, 7
    %v14 = vadd.s32 %v13, 8
    %v15 = vlaneseq
    %v16 = vand.u32 %v15, 127
    %v17 = vld [vmem:[%s0] sm:$0xff]
    %v18 = vld [vmem:[%s0 + $0x8] sm:$0xff]
    %v19 = vld [vmem:[%s0] sm:$0x1]
    %vm20 = vcmp.eq.s32.totalorder %v16, 0
    %v21 = vsel %vm20, %v19, 0.0
    %vm22 = vcmask 1040384
    %v23 = vsel %vm22, %v21, 0.0
    %24 = vadd.xlane.f32.xlu0 %v23
    %v25 = vpop.xlane.xlu0 %24
    %v26 = vsel %vm20, %v17, 0.0
    %v27 = vsel %vm20, %v18, 0.0
    %28 = vadd.xlane.f32.xlu0 %v26
    %v29 = vpop.xlane.xlu0 %28
    %30 = vadd.xlane.f32.xlu0 %v27
    %v31 = vpop.xlane.xlu0 %30
    %v32 = vrcp.pop %v25
    %v33 = vmul.f32 %v25, %v32
    %v34 = vsub.f32 2.0, %v33
    %v35 = vmul.f32 %v32, %v34
    %vm36 = vcmp.eq.s32.totalorder %v13, 0
    %vm37 = vcmp.eq.s32.totalorder %v14, 0
    %v38 = vsel %vm36, 1, 0
    %v39 = vsel %vm37, 1, 0
    %v40 = vcvt.s32.f32 %v38
    %v41 = vcvt.s32.f32 %v39
    %v42 = vsub.f32 %v29, %v40
    %v43 = vsub.f32 %v31, %v41
    %v44 = vmul.f32 %v19, %v35
    %v45 = vperm.slane %v44, 0
    %v46 = vmul.f32 %v42, %v45
    %v47 = vmul.f32 %v43, %v45
    %v48 = vsub.f32 %v17, %v46
    %v49 = vsub.f32 %v18, %v47
    %50 = vst [vmem:[%s0] sm:$0xff] %v48
    %51 = vst [vmem:[%s0 + $0x8] sm:$0xff] %v49
    %v52 = vld [vmem:[%s0] sm:$0xff]
    %v53 = vld [vmem:[%s0 + $0x8] sm:$0xff]
    %v54 = vld [vmem:[%s0 + $0x1] sm:$0x1]
    %vm55 = vcmp.eq.s32.totalorder %v16, 1
    %v56 = vsel %vm55, %v54, 0.0
    %v57 = vsel %vm22, %v56, 0.0
    %58 = vadd.xlane.f32.xlu0 %v57
    %v59 = vpop.xlane.xlu0 %58
    %v60 = vsel %vm55, %v52, 0.0
    %v61 = vsel %vm55, %v53, 0.0
    %62 = vadd.xlane.f32.xlu0 %v60
    %v63 = vpop.xlane.xlu0 %62
    %64 = vadd.xlane.f32.xlu0 %v61
    %v65 = vpop.xlane.xlu0 %64
    %v66 = vrcp.pop %v59
    %v67 = vmul.f32 %v59, %v66
    %v68 = vsub.f32 2.0, %v67
    %v69 = vmul.f32 %v66, %v68
    %vm70 = vcmp.eq.s32.totalorder %v13, 1
    %vm71 = vcmp.eq.s32.totalorder %v14, 1
    %v72 = vsel %vm70, 1, 0
    %v73 = vsel %vm71, 1, 0
    %v74 = vcvt.s32.f32 %v72
    %v75 = vcvt.s32.f32 %v73
    %v76 = vsub.f32 %v63, %v74
    %v77 = vsub.f32 %v65, %v75
    %v78 = vmul.f32 %v54, %v69
    %v79 = vperm.slane %v78, 0
    %v80 = vmul.f32 %v76, %v79
    %v81 = vmul.f32 %v77, %v79
    %v82 = vsub.f32 %v52, %v80
    %v83 = vsub.f32 %v53, %v81
    %84 = vst [vmem:[%s0] sm:$0xff] %v82
    %85 = vst [vmem:[%s0 + $0x8] sm:$0xff] %v83
    %v86 = vld [vmem:[%s0] sm:$0xff]
    %v87 = vld [vmem:[%s0 + $0x8] sm:$0xff]
    %v88 = vld [vmem:[%s0 + $0x2] sm:$0x1]
    %vm89 = vcmp.eq.s32.totalorder %v16, 2
    %v90 = vsel %vm89, %v88, 0.0
    %v91 = vsel %vm22, %v90, 0.0
    %92 = vadd.xlane.f32.xlu0 %v91
    %v93 = vpop.xlane.xlu0 %92
    %v94 = vsel %vm89, %v86, 0.0
    %v95 = vsel %vm89, %v87, 0.0
    %96 = vadd.xlane.f32.xlu0 %v94
    %v97 = vpop.xlane.xlu0 %96
    %98 = vadd.xlane.f32.xlu0 %v95
    %v99 = vpop.xlane.xlu0 %98
    %v100 = vrcp.pop %v93
    %v101 = vmul.f32 %v93, %v100
    %v102 = vsub.f32 2.0, %v101
    %v103 = vmul.f32 %v100, %v102
    %vm104 = vcmp.eq.s32.totalorder %v13, 2
    %vm105 = vcmp.eq.s32.totalorder %v14, 2
    %v106 = vsel %vm104, 1, 0
    %v107 = vsel %vm105, 1, 0
    %v108 = vcvt.s32.f32 %v106
    %v109 = vcvt.s32.f32 %v107
    %v110 = vsub.f32 %v97, %v108
    %v111 = vsub.f32 %v99, %v109
    %v112 = vmul.f32 %v88, %v103
    %v113 = vperm.slane %v112, 0
    %v114 = vmul.f32 %v110, %v113
    %v115 = vmul.f32 %v111, %v113
    %v116 = vsub.f32 %v86, %v114
    %v117 = vsub.f32 %v87, %v115
    %118 = vst [vmem:[%s0] sm:$0xff] %v116
    %119 = vst [vmem:[%s0 + $0x8] sm:$0xff] %v117
    %v120 = vld [vmem:[%s0] sm:$0xff]
    %v121 = vld [vmem:[%s0 + $0x8] sm:$0xff]
    %v122 = vld [vmem:[%s0 + $0x3] sm:$0x1]
    %vm123 = vcmp.eq.s32.totalorder %v16, 3
    %v124 = vsel %vm123, %v122, 0.0
    %v125 = vsel %vm22, %v124, 0.0
    %126 = vadd.xlane.f32.xlu0 %v125
    %v127 = vpop.xlane.xlu0 %126
    %v128 = vsel %vm123, %v120, 0.0
    %v129 = vsel %vm123, %v121, 0.0
    %130 = vadd.xlane.f32.xlu0 %v128
    %v131 = vpop.xlane.xlu0 %130
    %132 = vadd.xlane.f32.xlu0 %v129
    %v133 = vpop.xlane.xlu0 %132
    %v134 = vrcp.pop %v127
    %v135 = vmul.f32 %v127, %v134
    %v136 = vsub.f32 2.0, %v135
    %v137 = vmul.f32 %v134, %v136
    %vm138 = vcmp.eq.s32.totalorder %v13, 3
    %vm139 = vcmp.eq.s32.totalorder %v14, 3
    %v140 = vsel %vm138, 1, 0
    %v141 = vsel %vm139, 1, 0
    %v142 = vcvt.s32.f32 %v140
    %v143 = vcvt.s32.f32 %v141
    %v144 = vsub.f32 %v131, %v142
    %v145 = vsub.f32 %v133, %v143
    %v146 = vmul.f32 %v122, %v137
    %v147 = vperm.slane %v146, 0
    %v148 = vmul.f32 %v144, %v147
    %v149 = vmul.f32 %v145, %v147
    %v150 = vsub.f32 %v120, %v148
    %v151 = vsub.f32 %v121, %v149
    %152 = vst [vmem:[%s0] sm:$0xff] %v150
    %153 = vst [vmem:[%s0 + $0x8] sm:$0xff] %v151
    %v154 = vld [vmem:[%s0] sm:$0xff]
    %v155 = vld [vmem:[%s0 + $0x8] sm:$0xff]
    %v156 = vld [vmem:[%s0 + $0x4] sm:$0x1]
    %vm157 = vcmp.eq.s32.totalorder %v16, 4
    %v158 = vsel %vm157, %v156, 0.0
    %v159 = vsel %vm22, %v158, 0.0
    %160 = vadd.xlane.f32.xlu0 %v159
    %v161 = vpop.xlane.xlu0 %160
    %v162 = vsel %vm157, %v154, 0.0
    %v163 = vsel %vm157, %v155, 0.0
    %164 = vadd.xlane.f32.xlu0 %v162
    %v165 = vpop.xlane.xlu0 %164
    %166 = vadd.xlane.f32.xlu0 %v163
    %v167 = vpop.xlane.xlu0 %166
    %v168 = vrcp.pop %v161
    %v169 = vmul.f32 %v161, %v168
    %v170 = vsub.f32 2.0, %v169
    %v171 = vmul.f32 %v168, %v170
    %vm172 = vcmp.eq.s32.totalorder %v13, 4
    %vm173 = vcmp.eq.s32.totalorder %v14, 4
    %v174 = vsel %vm172, 1, 0
    %v175 = vsel %vm173, 1, 0
    %v176 = vcvt.s32.f32 %v174
    %v177 = vcvt.s32.f32 %v175
    %v178 = vsub.f32 %v165, %v176
    %v179 = vsub.f32 %v167, %v177
    %v180 = vmul.f32 %v156, %v171
    %v181 = vperm.slane %v180, 0
    %v182 = vmul.f32 %v178, %v181
    %v183 = vmul.f32 %v179, %v181
    %v184 = vsub.f32 %v154, %v182
    %v185 = vsub.f32 %v155, %v183
    %186 = vst [vmem:[%s0] sm:$0xff] %v184
    %187 = vst [vmem:[%s0 + $0x8] sm:$0xff] %v185
    %v188 = vld [vmem:[%s0] sm:$0xff]
    %v189 = vld [vmem:[%s0 + $0x8] sm:$0xff]
    %v190 = vld [vmem:[%s0 + $0x5] sm:$0x1]
    %vm191 = vcmp.eq.s32.totalorder %v16, 5
    %v192 = vsel %vm191, %v190, 0.0
    %v193 = vsel %vm22, %v192, 0.0
    %194 = vadd.xlane.f32.xlu0 %v193
    %v195 = vpop.xlane.xlu0 %194
    %v196 = vsel %vm191, %v188, 0.0
    %v197 = vsel %vm191, %v189, 0.0
    %198 = vadd.xlane.f32.xlu0 %v196
    %v199 = vpop.xlane.xlu0 %198
    %200 = vadd.xlane.f32.xlu0 %v197
    %v201 = vpop.xlane.xlu0 %200
    %v202 = vrcp.pop %v195
    %v203 = vmul.f32 %v195, %v202
    %v204 = vsub.f32 2.0, %v203
    %v205 = vmul.f32 %v202, %v204
    %vm206 = vcmp.eq.s32.totalorder %v13, 5
    %vm207 = vcmp.eq.s32.totalorder %v14, 5
    %v208 = vsel %vm206, 1, 0
    %v209 = vsel %vm207, 1, 0
    %v210 = vcvt.s32.f32 %v208
    %v211 = vcvt.s32.f32 %v209
    %v212 = vsub.f32 %v199, %v210
    %v213 = vsub.f32 %v201, %v211
    %v214 = vmul.f32 %v190, %v205
    %v215 = vperm.slane %v214, 0
    %v216 = vmul.f32 %v212, %v215
    %v217 = vmul.f32 %v213, %v215
    %v218 = vsub.f32 %v188, %v216
    %v219 = vsub.f32 %v189, %v217
    %220 = vst [vmem:[%s0] sm:$0xff] %v218
    %221 = vst [vmem:[%s0 + $0x8] sm:$0xff] %v219
    %v222 = vld [vmem:[%s0] sm:$0xff]
    %v223 = vld [vmem:[%s0 + $0x8] sm:$0xff]
    %v224 = vld [vmem:[%s0 + $0x6] sm:$0x1]
    %vm225 = vcmp.eq.s32.totalorder %v16, 6
    %v226 = vsel %vm225, %v224, 0.0
    %v227 = vsel %vm22, %v226, 0.0
    %228 = vadd.xlane.f32.xlu0 %v227
    %v229 = vpop.xlane.xlu0 %228
    %v230 = vsel %vm225, %v222, 0.0
    %v231 = vsel %vm225, %v223, 0.0
    %232 = vadd.xlane.f32.xlu0 %v230
    %v233 = vpop.xlane.xlu0 %232
    %234 = vadd.xlane.f32.xlu0 %v231
    %v235 = vpop.xlane.xlu0 %234
    %v236 = vrcp.pop %v229
    %v237 = vmul.f32 %v229, %v236
    %v238 = vsub.f32 2.0, %v237
    %v239 = vmul.f32 %v236, %v238
    %vm240 = vcmp.eq.s32.totalorder %v13, 6
    %vm241 = vcmp.eq.s32.totalorder %v14, 6
    %v242 = vsel %vm240, 1, 0
    %v243 = vsel %vm241, 1, 0
    %v244 = vcvt.s32.f32 %v242
    %v245 = vcvt.s32.f32 %v243
    %v246 = vsub.f32 %v233, %v244
    %v247 = vsub.f32 %v235, %v245
    %v248 = vmul.f32 %v224, %v239
    %v249 = vperm.slane %v248, 0
    %v250 = vmul.f32 %v246, %v249
    %v251 = vmul.f32 %v247, %v249
    %v252 = vsub.f32 %v222, %v250
    %v253 = vsub.f32 %v223, %v251
    %254 = vst [vmem:[%s0] sm:$0xff] %v252
    %255 = vst [vmem:[%s0 + $0x8] sm:$0xff] %v253
    %v256 = vld [vmem:[%s0] sm:$0xff]
    %v257 = vld [vmem:[%s0 + $0x8] sm:$0xff]
    %v258 = vld [vmem:[%s0 + $0x7] sm:$0x1]
    %vm259 = vcmp.eq.s32.totalorder %v16, 7
    %v260 = vsel %vm259, %v258, 0.0
    %v261 = vsel %vm22, %v260, 0.0
    %262 = vadd.xlane.f32.xlu0 %v261
    %v263 = vpop.xlane.xlu0 %262
    %v264 = vsel %vm259, %v256, 0.0
    %v265 = vsel %vm259, %v257, 0.0
    %266 = vadd.xlane.f32.xlu0 %v264
    %v267 = vpop.xlane.xlu0 %266
    %268 = vadd.xlane.f32.xlu0 %v265
    %v269 = vpop.xlane.xlu0 %268
    %v270 = vrcp.pop %v263
    %v271 = vmul.f32 %v263, %v270
    %v272 = vsub.f32 2.0, %v271
    %v273 = vmul.f32 %v270, %v272
    %vm274 = vcmp.eq.s32.totalorder %v13, 7
    %vm275 = vcmp.eq.s32.totalorder %v14, 7
    %v276 = vsel %vm274, 1, 0
    %v277 = vsel %vm275, 1, 0
    %v278 = vcvt.s32.f32 %v276
    %v279 = vcvt.s32.f32 %v277
    %v280 = vsub.f32 %v267, %v278
    %v281 = vsub.f32 %v269, %v279
    %v282 = vmul.f32 %v258, %v273
    %v283 = vperm.slane %v282, 0
    %v284 = vmul.f32 %v280, %v283
    %v285 = vmul.f32 %v281, %v283
    %v286 = vsub.f32 %v256, %v284
    %v287 = vsub.f32 %v257, %v285
    %288 = vst [vmem:[%s0] sm:$0xff] %v286
    %289 = vst [vmem:[%s0 + $0x8] sm:$0xff] %v287
    %v290 = vld [vmem:[%s0] sm:$0xff]
    %v291 = vld [vmem:[%s0 + $0x8] sm:$0xff]
    %v292 = vld [vmem:[%s0 + $0x8] sm:$0x1]
    %vm293 = vcmp.eq.s32.totalorder %v16, 8
    %v294 = vsel %vm293, %v292, 0.0
    %v295 = vsel %vm22, %v294, 0.0
    %296 = vadd.xlane.f32.xlu0 %v295
    %v297 = vpop.xlane.xlu0 %296
    %v298 = vsel %vm293, %v290, 0.0
    %v299 = vsel %vm293, %v291, 0.0
    %300 = vadd.xlane.f32.xlu0 %v298
    %v301 = vpop.xlane.xlu0 %300
    %302 = vadd.xlane.f32.xlu0 %v299
    %v303 = vpop.xlane.xlu0 %302
    %v304 = vrcp.pop %v297
    %v305 = vmul.f32 %v297, %v304
    %v306 = vsub.f32 2.0, %v305
    %v307 = vmul.f32 %v304, %v306
    %vm308 = vcmp.eq.s32.totalorder %v13, 8
    %vm309 = vcmp.eq.s32.totalorder %v14, 8
    %v310 = vsel %vm308, 1, 0
    %v311 = vsel %vm309, 1, 0
    %v312 = vcvt.s32.f32 %v310
    %v313 = vcvt.s32.f32 %v311
    %v314 = vsub.f32 %v301, %v312
    %v315 = vsub.f32 %v303, %v313
    %v316 = vmul.f32 %v292, %v307
    %v317 = vperm.slane %v316, 0
    %v318 = vmul.f32 %v314, %v317
    %v319 = vmul.f32 %v315, %v317
    %v320 = vsub.f32 %v290, %v318
    %v321 = vsub.f32 %v291, %v319
    %322 = vst [vmem:[%s0] sm:$0xff] %v320
    %323 = vst [vmem:[%s0 + $0x8] sm:$0xff] %v321
    %v324 = vld [vmem:[%s0] sm:$0xff]
    %v325 = vld [vmem:[%s0 + $0x8] sm:$0xff]
    %v326 = vld [vmem:[%s0 + $0x9] sm:$0x1]
    %vm327 = vcmp.eq.s32.totalorder %v16, 9
    %v328 = vsel %vm327, %v326, 0.0
    %v329 = vsel %vm22, %v328, 0.0
    %330 = vadd.xlane.f32.xlu0 %v329
    %v331 = vpop.xlane.xlu0 %330
    %v332 = vsel %vm327, %v324, 0.0
    %v333 = vsel %vm327, %v325, 0.0
    %334 = vadd.xlane.f32.xlu0 %v332
    %v335 = vpop.xlane.xlu0 %334
    %336 = vadd.xlane.f32.xlu0 %v333
    %v337 = vpop.xlane.xlu0 %336
    %v338 = vrcp.pop %v331
    %v339 = vmul.f32 %v331, %v338
    %v340 = vsub.f32 2.0, %v339
    %v341 = vmul.f32 %v338, %v340
    %vm342 = vcmp.eq.s32.totalorder %v13, 9
    %vm343 = vcmp.eq.s32.totalorder %v14, 9
    %v344 = vsel %vm342, 1, 0
    %v345 = vsel %vm343, 1, 0
    %v346 = vcvt.s32.f32 %v344
    %v347 = vcvt.s32.f32 %v345
    %v348 = vsub.f32 %v335, %v346
    %v349 = vsub.f32 %v337, %v347
    %v350 = vmul.f32 %v326, %v341
    %v351 = vperm.slane %v350, 0
    %v352 = vmul.f32 %v348, %v351
    %v353 = vmul.f32 %v349, %v351
    %v354 = vsub.f32 %v324, %v352
    %v355 = vsub.f32 %v325, %v353
    %356 = vst [vmem:[%s0] sm:$0xff] %v354
    %357 = vst [vmem:[%s0 + $0x8] sm:$0xff] %v355
    %v358 = vld [vmem:[%s0] sm:$0xff]
    %v359 = vld [vmem:[%s0 + $0x8] sm:$0xff]
    %v360 = vld [vmem:[%s0 + $0xa] sm:$0x1]
    %vm361 = vcmp.eq.s32.totalorder %v16, 10
    %v362 = vsel %vm361, %v360, 0.0
    %v363 = vsel %vm22, %v362, 0.0
    %364 = vadd.xlane.f32.xlu0 %v363
    %v365 = vpop.xlane.xlu0 %364
    %v366 = vsel %vm361, %v358, 0.0
    %v367 = vsel %vm361, %v359, 0.0
    %368 = vadd.xlane.f32.xlu0 %v366
    %v369 = vpop.xlane.xlu0 %368
    %370 = vadd.xlane.f32.xlu0 %v367
    %v371 = vpop.xlane.xlu0 %370
    %v372 = vrcp.pop %v365
    %v373 = vmul.f32 %v365, %v372
    %v374 = vsub.f32 2.0, %v373
    %v375 = vmul.f32 %v372, %v374
    %vm376 = vcmp.eq.s32.totalorder %v13, 10
    %vm377 = vcmp.eq.s32.totalorder %v14, 10
    %v378 = vsel %vm376, 1, 0
    %v379 = vsel %vm377, 1, 0
    %v380 = vcvt.s32.f32 %v378
    %v381 = vcvt.s32.f32 %v379
    %v382 = vsub.f32 %v369, %v380
    %v383 = vsub.f32 %v371, %v381
    %v384 = vmul.f32 %v360, %v375
    %v385 = vperm.slane %v384, 0
    %v386 = vmul.f32 %v382, %v385
    %v387 = vmul.f32 %v383, %v385
    %v388 = vsub.f32 %v358, %v386
    %v389 = vsub.f32 %v359, %v387
    %390 = vst [vmem:[%s0] sm:$0xff] %v388
    %391 = vst [vmem:[%s0 + $0x8] sm:$0xff] %v389
    %v392 = vld [vmem:[%s0] sm:$0xff]
    %v393 = vld [vmem:[%s0 + $0x8] sm:$0xff]
    %v394 = vld [vmem:[%s0 + $0xb] sm:$0x1]
    %vm395 = vcmp.eq.s32.totalorder %v16, 11
    %v396 = vsel %vm395, %v394, 0.0
    %v397 = vsel %vm22, %v396, 0.0
    %398 = vadd.xlane.f32.xlu0 %v397
    %v399 = vpop.xlane.xlu0 %398
    %v400 = vsel %vm395, %v392, 0.0
    %v401 = vsel %vm395, %v393, 0.0
    %402 = vadd.xlane.f32.xlu0 %v400
    %v403 = vpop.xlane.xlu0 %402
    %404 = vadd.xlane.f32.xlu0 %v401
    %v405 = vpop.xlane.xlu0 %404
    %v406 = vrcp.pop %v399
    %v407 = vmul.f32 %v399, %v406
    %v408 = vsub.f32 2.0, %v407
    %v409 = vmul.f32 %v406, %v408
    %vm410 = vcmp.eq.s32.totalorder %v13, 11
    %vm411 = vcmp.eq.s32.totalorder %v14, 11
    %v412 = vsel %vm410, 1, 0
    %v413 = vsel %vm411, 1, 0
    %v414 = vcvt.s32.f32 %v412
    %v415 = vcvt.s32.f32 %v413
    %v416 = vsub.f32 %v403, %v414
    %v417 = vsub.f32 %v405, %v415
    %v418 = vmul.f32 %v394, %v409
    %v419 = vperm.slane %v418, 0
    %v420 = vmul.f32 %v416, %v419
    %v421 = vmul.f32 %v417, %v419
    %v422 = vsub.f32 %v392, %v420
    %v423 = vsub.f32 %v393, %v421
    %424 = vst [vmem:[%s0] sm:$0xff] %v422
    %425 = vst [vmem:[%s0 + $0x8] sm:$0xff] %v423
    %v426 = vld [vmem:[%s0] sm:$0xff]
    %v427 = vld [vmem:[%s0 + $0x8] sm:$0xff]
    %v428 = vld [vmem:[%s0 + $0xc] sm:$0x1]
    %vm429 = vcmp.eq.s32.totalorder %v16, 12
    %v430 = vsel %vm429, %v428, 0.0
    %v431 = vsel %vm22, %v430, 0.0
    %432 = vadd.xlane.f32.xlu0 %v431
    %v433 = vpop.xlane.xlu0 %432
    %v434 = vsel %vm429, %v426, 0.0
    %v435 = vsel %vm429, %v427, 0.0
    %436 = vadd.xlane.f32.xlu0 %v434
    %v437 = vpop.xlane.xlu0 %436
    %438 = vadd.xlane.f32.xlu0 %v435
    %v439 = vpop.xlane.xlu0 %438
    %v440 = vrcp.pop %v433
    %v441 = vmul.f32 %v433, %v440
    %v442 = vsub.f32 2.0, %v441
    %v443 = vmul.f32 %v440, %v442
    %vm444 = vcmp.eq.s32.totalorder %v13, 12
    %vm445 = vcmp.eq.s32.totalorder %v14, 12
    %v446 = vsel %vm444, 1, 0
    %v447 = vsel %vm445, 1, 0
    %v448 = vcvt.s32.f32 %v446
    %v449 = vcvt.s32.f32 %v447
    %v450 = vsub.f32 %v437, %v448
    %v451 = vsub.f32 %v439, %v449
    %v452 = vmul.f32 %v428, %v443
    %v453 = vperm.slane %v452, 0
    %v454 = vmul.f32 %v450, %v453
    %v455 = vmul.f32 %v451, %v453
    %v456 = vsub.f32 %v426, %v454
    %v457 = vsub.f32 %v427, %v455
    %458 = vst [vmem:[%s0] sm:$0xff] %v456
    %459 = vst [vmem:[%s0 + $0x8] sm:$0xff] %v457
    %v460 = vld [vmem:[%s0] sm:$0xff]
    %v461 = vld [vmem:[%s0 + $0x8] sm:$0xff]
    %v462 = vld [vmem:[%s0 + $0xd] sm:$0x1]
    %vm463 = vcmp.eq.s32.totalorder %v16, 13
    %v464 = vsel %vm463, %v462, 0.0
    %v465 = vsel %vm22, %v464, 0.0
    %466 = vadd.xlane.f32.xlu0 %v465
    %v467 = vpop.xlane.xlu0 %466
    %v468 = vsel %vm463, %v460, 0.0
    %v469 = vsel %vm463, %v461, 0.0
    %470 = vadd.xlane.f32.xlu0 %v468
    %v471 = vpop.xlane.xlu0 %470
    %472 = vadd.xlane.f32.xlu0 %v469
    %v473 = vpop.xlane.xlu0 %472
    %v474 = vrcp.pop %v467
    %v475 = vmul.f32 %v467, %v474
    %v476 = vsub.f32 2.0, %v475
    %v477 = vmul.f32 %v474, %v476
    %vm478 = vcmp.eq.s32.totalorder %v13, 13
    %vm479 = vcmp.eq.s32.totalorder %v14, 13
    %v480 = vsel %vm478, 1, 0
    %v481 = vsel %vm479, 1, 0
    %v482 = vcvt.s32.f32 %v480
    %v483 = vcvt.s32.f32 %v481
    %v484 = vsub.f32 %v471, %v482
    %v485 = vsub.f32 %v473, %v483
    %v486 = vmul.f32 %v462, %v477
    %v487 = vperm.slane %v486, 0
    %v488 = vmul.f32 %v484, %v487
    %v489 = vmul.f32 %v485, %v487
    %v490 = vsub.f32 %v460, %v488
    %v491 = vsub.f32 %v461, %v489
    %492 = vst [vmem:[%s0] sm:$0xff] %v490
    %493 = vst [vmem:[%s0 + $0x8] sm:$0xff] %v491
    %v494 = vld [vmem:[%s0] sm:$0xff]
    %v495 = vld [vmem:[%s0 + $0x8] sm:$0xff]
    %v496 = vld [vmem:[%s0 + $0xe] sm:$0x1]
    %vm497 = vcmp.eq.s32.totalorder %v16, 14
    %v498 = vsel %vm497, %v496, 0.0
    %v499 = vsel %vm22, %v498, 0.0
    %500 = vadd.xlane.f32.xlu0 %v499
    %v501 = vpop.xlane.xlu0 %500
    %v502 = vsel %vm497, %v494, 0.0
    %v503 = vsel %vm497, %v495, 0.0
    %504 = vadd.xlane.f32.xlu0 %v502
    %v505 = vpop.xlane.xlu0 %504
    %506 = vadd.xlane.f32.xlu0 %v503
    %v507 = vpop.xlane.xlu0 %506
    %v508 = vrcp.pop %v501
    %v509 = vmul.f32 %v501, %v508
    %v510 = vsub.f32 2.0, %v509
    %v511 = vmul.f32 %v508, %v510
    %vm512 = vcmp.eq.s32.totalorder %v13, 14
    %vm513 = vcmp.eq.s32.totalorder %v14, 14
    %v514 = vsel %vm512, 1, 0
    %v515 = vsel %vm513, 1, 0
    %v516 = vcvt.s32.f32 %v514
    %v517 = vcvt.s32.f32 %v515
    %v518 = vsub.f32 %v505, %v516
    %v519 = vsub.f32 %v507, %v517
    %v520 = vmul.f32 %v496, %v511
    %v521 = vperm.slane %v520, 0
    %v522 = vmul.f32 %v518, %v521
    %v523 = vmul.f32 %v519, %v521
    %v524 = vsub.f32 %v494, %v522
    %v525 = vsub.f32 %v495, %v523
    %526 = vst [vmem:[%s0] sm:$0xff] %v524
    %527 = vst [vmem:[%s0 + $0x8] sm:$0xff] %v525
    %v528 = vld [vmem:[%s0] sm:$0xff]
    %v529 = vld [vmem:[%s0 + $0x8] sm:$0xff]
    %v530 = vld [vmem:[%s0 + $0xf] sm:$0x1]
    %vm531 = vcmp.eq.s32.totalorder %v16, 15
    %v532 = vsel %vm531, %v530, 0.0
    %v533 = vsel %vm22, %v532, 0.0
    %534 = vadd.xlane.f32.xlu0 %v533
    %v535 = vpop.xlane.xlu0 %534
    %v536 = vsel %vm531, %v528, 0.0
    %v537 = vsel %vm531, %v529, 0.0
    %538 = vadd.xlane.f32.xlu0 %v536
    %v539 = vpop.xlane.xlu0 %538
    %540 = vadd.xlane.f32.xlu0 %v537
    %v541 = vpop.xlane.xlu0 %540
    %v542 = vrcp.pop %v535
    %v543 = vmul.f32 %v535, %v542
    %v544 = vsub.f32 2.0, %v543
    %v545 = vmul.f32 %v542, %v544
    %vm546 = vcmp.eq.s32.totalorder %v13, 15
    %vm547 = vcmp.eq.s32.totalorder %v14, 15
    %v548 = vsel %vm546, 1, 0
    %v549 = vsel %vm547, 1, 0
    %v550 = vcvt.s32.f32 %v548
    %v551 = vcvt.s32.f32 %v549
    %v552 = vsub.f32 %v539, %v550
    %v553 = vsub.f32 %v541, %v551
    %v554 = vmul.f32 %v530, %v545
    %v555 = vperm.slane %v554, 0
    %v556 = vmul.f32 %v552, %v555
    %v557 = vmul.f32 %v553, %v555
    %v558 = vsub.f32 %v528, %v556
    %v559 = vsub.f32 %v529, %v557
    %560 = vst [vmem:[%s0] sm:$0xff] %v558
    %561 = vst [vmem:[%s0 + $0x8] sm:$0xff] %v559
    %v562 = vld [vmem:[%s0] sm:$0xff]
    %v563 = vld [vmem:[%s0 + $0x8] sm:$0xff]
    %vm564 = vcmp.eq.s32.totalorder %v16, 16
    %v565 = vsel %vm564, 1, 0
    %vm566 = vcmp.eq.s32.totalorder %v565, 1
    %v567 = vsel %vm566, %v562, 0.0
    %v568 = vsel %vm566, %v563, 0.0
    %569 = vadd.xlane.f32.xlu0 %v567
    %v570 = vpop.xlane.xlu0 %569
    %571 = vadd.xlane.f32.xlu0 %v568
    %v572 = vpop.xlane.xlu0 %571
    %v573 = vld [vmem:[%s1] sm:$0xff]
    %v574 = vld [vmem:[%s1 + $0x8] sm:$0xff]
    %v575 = vsub.f32 %v570, %v573
    %v576 = vsub.f32 %v572, %v574
    %v577 = vmul.f32 %v575, %v575
    %v578 = vmul.f32 %v576, %v576
    %vm579 = vcmask 7168
    %v580 = vsel %vm579, %v577, 0.0
    %v581 = vsel %vm579, %v578, 0.0
    %v582 = vadd.f32 %v580, %v581
    %583 = vadd.xlane.f32.xlu0 %v582
    %v584 = vpop.xlane.xlu0 %583
    %v585 = vrot.slane %v584, 4
    %v586 = vadd.f32 %v584, %v585
    %v587 = vrot.slane %v586, 2
    %v588 = vadd.f32 %v586, %v587
    %v589 = vrot.slane %v588, 1
    %v590 = vadd.f32 %v588, %v589
    %s591 = vtos %v590
    %v592 = vstv %s591
    %v593 = vrcp.pop 16.0
    %v594 = vmul.f32 16.0, %v593
    %v595 = vsub.f32 1.0, %v594
    %v596 = vmul.f32 %v593, %v595
    %v597 = vadd.f32 %v593, %v596
    %vm598 = vweird.f32 %v593
    %v599 = vsel %vm598, %v593, %v597
    %v600 = vmul.f32 %v592, %v599
    %vm601 = vcmask 0
    %602 = vst.msk [vmem:[#allocation2] sm:$0x1] %vm601, %v600
    // Predicated region
    $region10: #{tpu_custom_call.1} parent=1 // pred_check
      _
    $region11: #{tpu_custom_call.1} parent=1 // pred_check_branch
      %604 = sbr.rel (0) target = $region13
    $region12: #{tpu_custom_call.1} parent=1 // pred_region
      %606 = vsyncadd [#allocation3], 0
      %s608 = sshll.u32 [#allocation2], 4
      %s609 = int_to_ptr.vmem [resolvable:$true] %s608
      %s610 = sshll.u32 %s2, 4
      %s611 = int_to_ptr.hbm [resolvable:$true] %s610
      %613 = dma.vmem_to_hbm [thread:$0]  %s609, 16, %s611, [#allocation3]
    $region13: #{tpu_custom_call.1} parent=1 // pred_fallthru
      _
    // Predicated region
    $region14: #{tpu_custom_call.1} parent=1 // pred_check
      _
    $region15: #{tpu_custom_call.1} parent=1 // pred_check_branch
      %615 = sbr.rel (0) target = $region17
    $region16: #{tpu_custom_call.1} parent=1 // pred_region
      %617 = dma.done [#allocation3], 16
    $region17: #{tpu_custom_call.1} parent=1 // pred_fallthru
      _
    %618 = vsyncpa [#allocation3], 1

</llo_original>
